<compile_context>
chip_gen: v7x
topology: tpu7x:2x2x1
jax: 0.10.0
libtpu: 0.0.40
codegen_flags: <defaults>
</compile_context>

<pallas_src>
import math
import functools
import numpy as np
import jax
import jax.numpy as jnp
from jax.experimental import pallas as pl
from jax.experimental.pallas import tpu as pltpu

# Full f32 precision for the in-kernel MXU dots and the pure-JAX reference so the
# 1e-3 validation below stays tight.  For bandwidth-bound production shapes pass
# compute_dtype=jnp.bfloat16 to the wrapper (halves x/W DMA bytes; accumulation
# stays f32 via preferred_element_type) and re-validate tolerances.
jax.config.update("jax_default_matmul_precision", "highest")

NEG_INF = -1.0e12


def _global_pointer_kernel(x_ref, w_ref, b_ref, cos_ref, sin_ref, rot_ref,
                           mul_ref, add_ref, out_ref, *, head_size, inv_scale):
    """One (batch, head) pair per grid step.

    per-head dense slice -> RoPE (q,k jointly) -> QK^T -> fused mask:
        out = (q/sqrt(d)) @ k^T * M + A
    where M, A are precomputed (N, N) inputs that fold the row/col masking, the
    strict-lower-triangle bias and the 1/sqrt(d) scaling into one mul + one add.
    """
    d = head_size
    x = x_ref[0]                                                        # (N, hidden)
    # Per-head column block of the dense layer: [q | k] for this head -> (N, 2d).
    proj = jnp.dot(x, w_ref[0], preferred_element_type=jnp.float32) + b_ref[0]
    # RoPE pairwise swap-with-sign via a (2d, 2d) permutation matrix on the MXU
    # (entries 0/±1 -> exact), applied to q and k in a single pass.
    proj2 = jnp.dot(proj, rot_ref[...], preferred_element_type=jnp.float32)
    pr = proj * cos_ref[...] + proj2 * sin_ref[...]                     # (N, 2d)
    q = pr[:, :d] * inv_scale        # fold 1/sqrt(d) into q
    k = pr[:, d:]
    logits = jax.lax.dot_general(q, k, (((1,), (1,)), ((), ())),        # 'md,nd->mn'
                                 preferred_element_type=jnp.float32)    # (N, N)
    out_ref[0, 0, :, :] = logits * mul_ref[0] + add_ref[0]


def global_pointer_pallas(x, W, b, mask, heads, head_size, *, compute_dtype=jnp.float32):
    B, N, hidden = x.shape
    d = head_size
    assert d % 2 == 0, "RoPE requires an even head_size"
    out_f = heads * d * 2
    assert W.shape == (hidden, out_f) and b.shape == (out_f,)
    scale = float(d) ** 0.5

    # --- constants built once on the host side, reused across every (batch, head) step ---
    # Sin/Cos tables replicating SinusoidalPositionEmbedding + torch .repeat(1,1,1,2) tiling.
    idx = jnp.arange(d // 2, dtype=jnp.float32)
    theta = jnp.power(10000.0, -2.0 * idx / d)
    ang = jnp.arange(N, dtype=jnp.float32)[:, None] * theta[None, :]        # (N, d/2)
    cos_d = jnp.tile(jnp.cos(ang), (1, 2))                                  # (N, d)
    sin_d = jnp.tile(jnp.sin(ang), (1, 2))
    cos2 = jnp.tile(cos_d, (1, 2)).astype(jnp.float32)                      # (N, 2d): same table for q and k
    sin2 = jnp.tile(sin_d, (1, 2)).astype(jnp.float32)

    # Pairwise swap-with-sign matrix R: (t @ R)[:, 2i] = -t[:, 2i+1], (t @ R)[:, 2i+1] = t[:, 2i].
    # (Pairs never straddle the q|k boundary since d is even.)
    R = np.zeros((2 * d, 2 * d), np.float32)
    R[np.arange(1, 2 * d, 2), np.arange(0, 2 * d, 2)] = -1.0
    R[np.arange(0, 2 * d, 2), np.arange(1, 2 * d, 2)] = 1.0
    R = jnp.asarray(R)

    # Fused masking:  out = (q/sqrt(d)) @ k^T * M + A
    #   M = mrow * mcol
    #   A = (NEG_INF*((1-mrow)*mcol + (1-mcol)) - tril*1e12) / sqrt(d)
    # algebraically identical to: mask rows -> mask cols -> subtract tril -> / sqrt(d).
    m = mask.astype(jnp.float32)
    mrow = m[:, :, None]                                                    # (B, N, 1)
    mcol = m[:, None, :]                                                    # (B, 1, N)
    mul_mask = (mrow * mcol).astype(jnp.float32)                            # (B, N, N)
    tril = jnp.tril(jnp.ones((N, N), jnp.float32), k=-1)
    add_mask = ((NEG_INF * ((1.0 - mrow) * mcol + (1.0 - mcol))
                 - tril * 1.0e12) / scale).astype(jnp.float32)              # (B, N, N)

    # Per-head views of the dense layer so the heads grid axis selects them via BlockSpec.
    W_h = W.reshape(hidden, heads, 2 * d).transpose(1, 0, 2).astype(compute_dtype)  # (heads, hidden, 2d)
    b_h = b.reshape(heads, 1, 2 * d).astype(compute_dtype)                          # (heads, 1, 2d)
    x_c = x.astype(compute_dtype)

    # TODO(synk): for production N/hidden that are not multiples of (8,128), pad N (and the
    # masks) up front so the (N,N) output stores stay unmasked lane-dense vst.

    kernel = functools.partial(_global_pointer_kernel, head_size=d, inv_scale=1.0 / scale)
    return pl.pallas_call(
        kernel,
        out_shape=jax.ShapeDtypeStruct((B, heads, N, N), jnp.float32),
        grid=(B, heads),
        in_specs=[
            pl.BlockSpec((1, N, hidden), lambda bi, hi: (bi, 0, 0)),      # x   (resident per batch)
            pl.BlockSpec((1, hidden, 2 * d), lambda bi, hi: (hi, 0, 0)),  # W   per-head column block
            pl.BlockSpec((1, 1, 2 * d), lambda bi, hi: (hi, 0, 0)),       # b   per-head
            pl.BlockSpec((N, 2 * d), lambda bi, hi: (0, 0)),              # cos table (constant)
            pl.BlockSpec((N, 2 * d), lambda bi, hi: (0, 0)),              # sin table (constant)
            pl.BlockSpec((2 * d, 2 * d), lambda bi, hi: (0, 0)),          # RoPE swap matrix (constant)
            pl.BlockSpec((1, N, N), lambda bi, hi: (bi, 0, 0)),           # fused multiplicative mask
            pl.BlockSpec((1, N, N), lambda bi, hi: (bi, 0, 0)),           # fused additive mask/tril/scale
        ],
        out_specs=pl.BlockSpec((1, 1, N, N), lambda bi, hi: (bi, hi, 0, 0)),
        compiler_params=pltpu.CompilerParams(
            dimension_semantics=("parallel", "parallel")),
    )(x_c, W_h, b_h, cos2, sin2, R, mul_mask, add_mask)


def global_pointer_ref(x, W, b, mask, heads, head_size):
    """Pure-JAX transcription of the PyTorch forward (for verification)."""
    B, N, hidden = x.shape
    d = head_size
    proj = jnp.einsum('bnh,ho->bno', x, W) + b
    proj = proj.reshape(B, N, heads, 2 * d)
    qw, kw = proj[..., :d], proj[..., d:]
    idx = jnp.arange(d // 2, dtype=jnp.float32)
    theta = jnp.power(10000.0, -2.0 * idx / d)
    ang = jnp.arange(N, dtype=jnp.float32)[:, None] * theta[None, :]
    cos_pos = jnp.tile(jnp.cos(ang), (1, 2))[None, :, None, :]
    sin_pos = jnp.tile(jnp.sin(ang), (1, 2))[None, :, None, :]

    def rope(t):
        t2 = jnp.stack([-t[..., 1::2], t[..., ::2]], axis=-1).reshape(t.shape)
        return t * cos_pos + t2 * sin_pos

    qw = rope(qw)
    kw = rope(kw)
    logits = jnp.einsum('bmhd,bnhd->bhmn', qw, kw)
    m = mask.astype(logits.dtype)
    mr = m[:, None, :, None]
    mc = m[:, None, None, :]
    logits = logits * mr + NEG_INF * (1.0 - mr)
    logits = logits * mc + NEG_INF * (1.0 - mc)
    tril = jnp.tril(jnp.ones((N, N), logits.dtype), k=-1)
    logits = logits - tril * 1.0e12
    return logits / (d ** 0.5)


if __name__ == "__main__":
    B, N, hidden = 2, 8, 32
    heads, head_size = 2, 16

    key = jax.random.PRNGKey(0)
    kx, kw, kb = jax.random.split(key, 3)
    x = jax.random.normal(kx, (B, N, hidden), jnp.float32)
    W = jax.random.normal(kw, (hidden, heads * head_size * 2), jnp.float32) / math.sqrt(hidden)
    b = 0.01 * jax.random.normal(kb, (heads * head_size * 2,), jnp.float32)
    # valid-length mask: batch 0 full, batch 1 has last 2 positions padded
    mask = (jnp.arange(N)[None, :] < jnp.array([[N], [N - 2]])).astype(jnp.float32)

    out = global_pointer_pallas(x, W, b, mask, heads, head_size)
    out = jax.block_until_ready(out)

    ref = global_pointer_ref(x, W, b, mask, heads, head_size)
    assert out.shape == (B, heads, N, N)
    np.testing.assert_allclose(np.asarray(out), np.asarray(ref), rtol=1e-3, atol=1e-3)
    print("KERNEL_OK")
</pallas_src>

<mosaic_0001>
module attributes {stable_mosaic.version = 11 : i64} {
  func.func @_global_pointer_kernel(%arg0: i32, %arg1: i32, %arg2: memref<1x8x32xf32, #tpu.memory_space<vmem>>, %arg3: memref<1x32x32xf32, #tpu.memory_space<vmem>>, %arg4: memref<1x1x32xf32, #tpu.memory_space<vmem>>, %arg5: memref<8x32xf32, #tpu.memory_space<vmem>>, %arg6: memref<8x32xf32, #tpu.memory_space<vmem>>, %arg7: memref<32x32xf32, #tpu.memory_space<vmem>>, %arg8: memref<1x8x8xf32, #tpu.memory_space<vmem>>, %arg9: memref<1x8x8xf32, #tpu.memory_space<vmem>>, %arg10: memref<1x1x8x8xf32, #tpu.memory_space<vmem>>) attributes {dimension_semantics = [#tpu.dimension_semantics<parallel>, #tpu.dimension_semantics<parallel>], iteration_bounds = array<i64: 2, 2>, scalar_prefetch = 0 : i64, scratch_operands = 0 : i64, tpu.core_type = #tpu.core_type<tc>, window_params = [{transform_indices = @transform_0, window_bounds = array<i64: 1, 8, 32>}, {transform_indices = @transform_1, window_bounds = array<i64: 1, 32, 32>}, {transform_indices = @transform_2, window_bounds = array<i64: 1, 1, 32>}, {pipeline_mode = #tpu.pipeline_mode<synchronous>, transform_indices = @transform_3, window_bounds = array<i64: 8, 32>}, {pipeline_mode = #tpu.pipeline_mode<synchronous>, transform_indices = @transform_4, window_bounds = array<i64: 8, 32>}, {pipeline_mode = #tpu.pipeline_mode<synchronous>, transform_indices = @transform_5, window_bounds = array<i64: 32, 32>}, {transform_indices = @transform_6, window_bounds = array<i64: 1, 8, 8>}, {transform_indices = @transform_7, window_bounds = array<i64: 1, 8, 8>}, {transform_indices = @transform_8, window_bounds = array<i64: 1, 1, 8, 8>}]} {
    %c0 = arith.constant 0 : index
    %c0_0 = arith.constant 0 : index
    %c0_1 = arith.constant 0 : index
    %0 = vector.load %arg2[%c0, %c0_0, %c0_1] : memref<1x8x32xf32, #tpu.memory_space<vmem>>, vector<1x8x32xf32>
    %1 = vector.shape_cast %0 : vector<1x8x32xf32> to vector<8x32xf32>
    %c0_2 = arith.constant 0 : index
    %c0_3 = arith.constant 0 : index
    %c0_4 = arith.constant 0 : index
    %2 = vector.load %arg3[%c0_2, %c0_3, %c0_4] : memref<1x32x32xf32, #tpu.memory_space<vmem>>, vector<1x32x32xf32>
    %3 = vector.shape_cast %2 : vector<1x32x32xf32> to vector<32x32xf32>
    %cst = arith.constant dense<0.000000e+00> : vector<8x32xf32>
    %4 = tpu.matmul %1, %3, %cst {dimension_numbers = #tpu.dot_dimension_numbers<[1], [0], [0], [1], [0, 0, 1, 1], [], []>, precision = #tpu.contract_precision<fp32>} : vector<8x32xf32>, vector<32x32xf32>, vector<8x32xf32> -> vector<8x32xf32>
    %c0_5 = arith.constant 0 : index
    %c0_6 = arith.constant 0 : index
    %c0_7 = arith.constant 0 : index
    %5 = vector.load %arg4[%c0_5, %c0_6, %c0_7] : memref<1x1x32xf32, #tpu.memory_space<vmem>>, vector<1x1x32xf32>
    %6 = vector.shape_cast %5 : vector<1x1x32xf32> to vector<1x32xf32>
    %7 = vector.broadcast %6 : vector<1x32xf32> to vector<8x32xf32>
    %8 = arith.addf %4, %7 : vector<8x32xf32>
    %c0_8 = arith.constant 0 : index
    %c0_9 = arith.constant 0 : index
    %9 = vector.load %arg7[%c0_8, %c0_9] : memref<32x32xf32, #tpu.memory_space<vmem>>, vector<32x32xf32>
    %cst_10 = arith.constant dense<0.000000e+00> : vector<8x32xf32>
    %10 = tpu.matmul %8, %9, %cst_10 {dimension_numbers = #tpu.dot_dimension_numbers<[1], [0], [0], [1], [0, 0, 1, 1], [], []>, precision = #tpu.contract_precision<fp32>} : vector<8x32xf32>, vector<32x32xf32>, vector<8x32xf32> -> vector<8x32xf32>
    %c0_11 = arith.constant 0 : index
    %c0_12 = arith.constant 0 : index
    %11 = vector.load %arg5[%c0_11, %c0_12] : memref<8x32xf32, #tpu.memory_space<vmem>>, vector<8x32xf32>
    %12 = arith.mulf %8, %11 : vector<8x32xf32>
    %c0_13 = arith.constant 0 : index
    %c0_14 = arith.constant 0 : index
    %13 = vector.load %arg6[%c0_13, %c0_14] : memref<8x32xf32, #tpu.memory_space<vmem>>, vector<8x32xf32>
    %14 = arith.mulf %10, %13 : vector<8x32xf32>
    %15 = arith.addf %12, %14 : vector<8x32xf32>
    %16 = vector.extract_strided_slice %15 {offsets = [0, 0], sizes = [8, 16], strides = [1, 1]} : vector<8x32xf32> to vector<8x16xf32>
    %cst_15 = arith.constant 2.500000e-01 : f32
    %17 = vector.broadcast %cst_15 : f32 to vector<8x16xf32>
    %18 = arith.mulf %16, %17 : vector<8x16xf32>
    %19 = vector.extract_strided_slice %15 {offsets = [0, 16], sizes = [8, 16], strides = [1, 1]} : vector<8x32xf32> to vector<8x16xf32>
    %cst_16 = arith.constant dense<0.000000e+00> : vector<8x8xf32>
    %20 = tpu.matmul %18, %19, %cst_16 {dimension_numbers = #tpu.dot_dimension_numbers<[1], [1], [0], [0], [0, 0, 1, 0], [], []>, precision = #tpu.contract_precision<fp32>} : vector<8x16xf32>, vector<8x16xf32>, vector<8x8xf32> -> vector<8x8xf32>
    %c0_17 = arith.constant 0 : index
    %c0_18 = arith.constant 0 : index
    %c0_19 = arith.constant 0 : index
    %21 = vector.load %arg8[%c0_17, %c0_18, %c0_19] : memref<1x8x8xf32, #tpu.memory_space<vmem>>, vector<1x8x8xf32>
    %22 = vector.shape_cast %21 : vector<1x8x8xf32> to vector<8x8xf32>
    %23 = arith.mulf %20, %22 : vector<8x8xf32>
    %c0_20 = arith.constant 0 : index
    %c0_21 = arith.constant 0 : index
    %c0_22 = arith.constant 0 : index
    %24 = vector.load %arg9[%c0_20, %c0_21, %c0_22] : memref<1x8x8xf32, #tpu.memory_space<vmem>>, vector<1x8x8xf32>
    %25 = vector.shape_cast %24 : vector<1x8x8xf32> to vector<8x8xf32>
    %26 = arith.addf %23, %25 : vector<8x8xf32>
    %c0_23 = arith.constant 0 : index
    %c0_24 = arith.constant 0 : index
    %c0_25 = arith.constant 0 : index
    %c0_26 = arith.constant 0 : index
    %27 = vector.load %arg10[%c0_23, %c0_24, %c0_25, %c0_26] : memref<1x1x8x8xf32, #tpu.memory_space<vmem>>, vector<1x1x8x8xf32>
    %28 = vector.shape_cast %27 : vector<1x1x8x8xf32> to vector<8x8xf32>
    %29 = vector.shape_cast %26 : vector<8x8xf32> to vector<1x1x8x8xf32>
    tpu.vector_store %arg10[%c0_23, %c0_24, %c0_25, %c0_26], %29 {strides = array<i32>} : memref<1x1x8x8xf32, #tpu.memory_space<vmem>>, vector<1x1x8x8xf32>,
    return
  }
  func.func @transform_0(%arg0: i32, %arg1: i32) -> (i32, i32, i32) {
    %c0_i32 = arith.constant 0 : i32
    %c0_i32_0 = arith.constant 0 : i32
    %c0_i32_1 = arith.constant 0 : i32
    return %arg0, %c0_i32, %c0_i32_0 : i32, i32, i32
  }
  func.func @transform_1(%arg0: i32, %arg1: i32) -> (i32, i32, i32) {
    %c0_i32 = arith.constant 0 : i32
    %c0_i32_0 = arith.constant 0 : i32
    %c0_i32_1 = arith.constant 0 : i32
    return %arg1, %c0_i32, %c0_i32_0 : i32, i32, i32
  }
  func.func @transform_2(%arg0: i32, %arg1: i32) -> (i32, i32, i32) {
    %c0_i32 = arith.constant 0 : i32
    %c0_i32_0 = arith.constant 0 : i32
    %c0_i32_1 = arith.constant 0 : i32
    return %arg1, %c0_i32, %c0_i32_0 : i32, i32, i32
  }
  func.func @transform_3(%arg0: i32, %arg1: i32) -> (i32, i32) {
    %c0_i32 = arith.constant 0 : i32
    %c0_i32_0 = arith.constant 0 : i32
    %c0_i32_1 = arith.constant 0 : i32
    return %c0_i32, %c0_i32_0 : i32, i32
  }
  func.func @transform_4(%arg0: i32, %arg1: i32) -> (i32, i32) {
    %c0_i32 = arith.constant 0 : i32
    %c0_i32_0 = arith.constant 0 : i32
    %c0_i32_1 = arith.constant 0 : i32
    return %c0_i32, %c0_i32_0 : i32, i32
  }
  func.func @transform_5(%arg0: i32, %arg1: i32) -> (i32, i32) {
    %c0_i32 = arith.constant 0 : i32
    %c0_i32_0 = arith.constant 0 : i32
    %c0_i32_1 = arith.constant 0 : i32
    return %c0_i32, %c0_i32_0 : i32, i32
  }
  func.func @transform_6(%arg0: i32, %arg1: i32) -> (i32, i32, i32) {
    %c0_i32 = arith.constant 0 : i32
    %c0_i32_0 = arith.constant 0 : i32
    %c0_i32_1 = arith.constant 0 : i32
    return %arg0, %c0_i32, %c0_i32_0 : i32, i32, i32
  }
  func.func @transform_7(%arg0: i32, %arg1: i32) -> (i32, i32, i32) {
    %c0_i32 = arith.constant 0 : i32
    %c0_i32_0 = arith.constant 0 : i32
    %c0_i32_1 = arith.constant 0 : i32
    return %arg0, %c0_i32, %c0_i32_0 : i32, i32, i32
  }
  func.func @transform_8(%arg0: i32, %arg1: i32) -> (i32, i32, i32, i32) {
    %c0_i32 = arith.constant 0 : i32
    %c0_i32_0 = arith.constant 0 : i32
    %c0_i32_1 = arith.constant 0 : i32
    return %arg0, %arg1, %c0_i32, %c0_i32_0 : i32, i32, i32, i32
  }
}

</mosaic_0001>

<llo_original>
// kernel: tpu_custom_call.1
$region0: #{tpu_custom_call.1}
  #allocation0 [shape = 'u32[]', space=smem, size = 0x4, offset = 0x4, fixed_abs, tag = 'smem constant byte address 0x4 - core index']
  #allocation1 [shape = 'u32[144,128]{1,0:T(1,128)}', space=vmem, size = 0x12000, scoped, tag = 'internal scratch']
  %s0 = inlined_call_operand.hbm [shape: f32[2,8,32], index: 0, kind: input, shape index: {}]
  %s1 = inlined_call_operand.hbm [shape: f32[2,32,32], index: 1, kind: input, shape index: {}]
  %s2 = inlined_call_operand.vmem [shape: f32[2,1,32], index: 2, kind: input, shape index: {}]
  %s3 = inlined_call_operand.hbm [shape: f32[8,32], index: 3, kind: input, shape index: {}]
  %s4 = inlined_call_operand.hbm [shape: f32[8,32], index: 4, kind: input, shape index: {}]
  %s5 = inlined_call_operand.hbm [shape: f32[32,32], index: 5, kind: input, shape index: {}]
  %s6 = inlined_call_operand.vmem [shape: f32[2,8,8], index: 6, kind: input, shape index: {}]
  %s7 = inlined_call_operand.hbm [shape: f32[2,8,8], index: 7, kind: input, shape index: {}]
  %s8 = inlined_call_operand.hbm [shape: f32[2,2,8,8], index: 8, kind: output, shape index: {}]
  %s9 = sld [smem:[#allocation0]]
  $region89: #{tpu_custom_call.1} parent=0
    _
  %s11 = ssub.s32 1, %s9
  %s12 = scalar_select 0, %s11, %s9
  $region1: #{tpu_custom_call.1} parent=0
    #allocation2 [shape = 'u8[8192]{0}', space=vmem, size = 0x2000, scoped, tag = 'input window, operand 0']
    #allocation3 [shape = 's32[2]{0}', space=sflag, size = 0x8, scoped, tag = 'scoped memory for tpu_custom_call.1']
    #allocation4 [shape = 's32[2]{0}', space=sflag, size = 0x8, scoped, tag = 'scoped memory for tpu_custom_call.1']
    #allocation5 [shape = 'u8[32768]{0}', space=vmem, size = 0x8000, scoped, tag = 'input window, operand 1']
    #allocation6 [shape = 's32[2]{0}', space=sflag, size = 0x8, scoped, tag = 'scoped memory for tpu_custom_call.1']
    #allocation7 [shape = 'u8[4096]{0}', space=vmem, size = 0x1000, scoped, tag = 'input window, operand 3, single buffered']
    #allocation8 [shape = 'u8[4096]{0}', space=vmem, size = 0x1000, scoped, tag = 'input window, operand 4, single buffered']
    #allocation9 [shape = 's32[1]{0}', space=sflag, size = 0x4, scoped, tag = 'scoped memory for tpu_custom_call.1']
    #allocation10 [shape = 'u8[16384]{0}', space=vmem, size = 0x4000, scoped, tag = 'input window, operand 5, single buffered']
    #allocation11 [shape = 'u8[8192]{0}', space=vmem, size = 0x2000, scoped, tag = 'input window, operand 7']
    #allocation12 [shape = 's32[2]{0}', space=sflag, size = 0x8, scoped, tag = 'scoped memory for tpu_custom_call.1']
    #allocation13 [shape = 'u8[8192]{0}', space=vmem, size = 0x2000, scoped, tag = 'output window, operand 0']
    %13 = vsyncpa [#allocation3], 0
    %s14 = scalar_lea.sflag [#allocation3], 1
    %15 = vsyncpa %s14, 0
    %16 = vsyncpa [#allocation6], 0
    %s17 = scalar_lea.sflag [#allocation6], 1
    %18 = vsyncpa %s17, 0
    %19 = vsyncpa [#allocation9], 0
    %20 = vsyncpa [#allocation12], 0
    %s21 = scalar_lea.sflag [#allocation12], 1
    %22 = vsyncpa %s21, 0
    %23 = vsyncpa [#allocation4], 0
    %s24 = scalar_lea.sflag [#allocation4], 1
    %25 = vsyncpa %s24, 0
    loop: start=0, step=1, limit=6
    $region2: #{tpu_custom_call.1} parent=1 // loop_pre_header
      _
    $region3: #{tpu_custom_call.1} parent=1 // loop_header
      %s27 = sphi 0, %s31
      %p28 = scmp.ge.s32.totalorder %s27, 6
      %s34 = sphi 0, %s46
      %s35 = sphi 0, %s42
      %s36 = sphi 0, %s34
      %s37 = sphi 0, %s35
      %s38 = sphi 0, %s36
      %s39 = sphi 0, %s37
      %s49 = sphi 0, %s51
      %s52 = sphi 0, %s49
      %s53 = sphi 0, %s52
      %s69 = sphi 0, %s53
      %s75 = sphi 0, %s77
      %s78 = sphi 0, %s75
      %s79 = sphi 0, %s78
      %s95 = sphi 0, %s79
      %s101 = sphi 0, %s103
      %s104 = sphi 0, %s101
      %s105 = sphi 0, %s104
      %s121 = sphi 0, %s105
      %s125 = sphi 0, %s125
      %s127 = sphi 0, %s125
      %s128 = sphi 0, %s127
      %s142 = sphi 0, %s128
      %s146 = sphi 0, %s146
      %s148 = sphi 0, %s146
      %s149 = sphi 0, %s148
      %s163 = sphi 0, %s149
      %s167 = sphi 0, %s167
      %s169 = sphi 0, %s167
      %s170 = sphi 0, %s169
      %s184 = sphi 0, %s170
      %s190 = sphi 0, %s192
      %s193 = sphi 0, %s190
      %s194 = sphi 0, %s193
      %s210 = sphi 0, %s194
      %s216 = sphi 0, %s218
      %s219 = sphi 0, %s216
      %s220 = sphi 0, %s219
      %s236 = sphi 0, %s220
      %s244 = sphi 0, %s246
      %s247 = sphi 0, %s244
      %s248 = sphi 0, %s247
      %s264 = sphi 0, %s248
    $region4: #{tpu_custom_call.1} parent=1 // loop_header_branch
      %30 = sbr.rel (%p28) target = $region8
    $region5: #{tpu_custom_call.1} parent=1 // loop_body
      %s32 = ssub.s32 %s27, 1
      %s33 = ssub.s32 %s27, 2
      %s40 = sadd.s32 1, %s35
      %p41 = scmp.ge.s32.totalorder %s40, 2
      %s42 = scalar_select %p41, 0, %s40
      %s43 = sadd.s32 1, %s34
      %s44 = scalar_select %p41, %s43, %s34
      %p45 = scmp.ge.s32.totalorder %s44, 2
      %s46 = scalar_select %p45, 0, %s44
      %s47 = ssub.s32 %s34, %s46
      %p48 = scmp.eq.s32.totalorder %s47, 0
      %s50 = sadd.s32 %s49, 1
      %s51 = scalar_select %p48, %s49, %s50
      %p54 = pneg %p48
      %p55 = scmp.eq.s32.totalorder %s27, 3
      %p56 = por %p54, %p55
      %p57 = scmp.ne.s32.totalorder %s49, %s52
      %p58 = scmp.eq.s32.totalorder %s27, 0
      %p59 = por %p57, %p58
      %p60 = scmp.ne.s32.totalorder %s49, %s52
      %p61 = scmp.eq.s32.totalorder %s32, 3
      %p62 = por %p60, %p61
      %p63 = scmp.ne.s32.totalorder %s52, %s53
      %p64 = scmp.eq.s32.totalorder %s32, 0
      %p65 = por %p63, %p64
      %p66 = scmp.ne.s32.totalorder %s52, %s53
      %p67 = scmp.eq.s32.totalorder %s33, 3
      %p68 = por %p66, %p67
      %p70 = scmp.ne.s32.totalorder %s53, %s69
      %p71 = scmp.eq.s32.totalorder %s33, 0
      %p72 = por %p70, %p71
      %s73 = ssub.s32 %s35, %s42
      %p74 = scmp.eq.s32.totalorder %s73, 0
      %s76 = sadd.s32 %s75, 1
      %s77 = scalar_select %p74, %s75, %s76
      %p80 = pneg %p74
      %p81 = scmp.eq.s32.totalorder %s27, 3
      %p82 = por %p80, %p81
      %p83 = scmp.ne.s32.totalorder %s75, %s78
      %p84 = scmp.eq.s32.totalorder %s27, 0
      %p85 = por %p83, %p84
      %p86 = scmp.ne.s32.totalorder %s75, %s78
      %p87 = scmp.eq.s32.totalorder %s32, 3
      %p88 = por %p86, %p87
      %p89 = scmp.ne.s32.totalorder %s78, %s79
      %p90 = scmp.eq.s32.totalorder %s32, 0
      %p91 = por %p89, %p90
      %p92 = scmp.ne.s32.totalorder %s78, %s79
      %p93 = scmp.eq.s32.totalorder %s33, 3
      %p94 = por %p92, %p93
      %p96 = scmp.ne.s32.totalorder %s79, %s95
      %p97 = scmp.eq.s32.totalorder %s33, 0
      %p98 = por %p96, %p97
      %s99 = ssub.s32 %s35, %s42
      %p100 = scmp.eq.s32.totalorder %s99, 0
      %s102 = sadd.s32 %s101, 1
      %s103 = scalar_select %p100, %s101, %s102
      %p106 = pneg %p100
      %p107 = scmp.eq.s32.totalorder %s27, 3
      %p108 = por %p106, %p107
      %p109 = scmp.ne.s32.totalorder %s101, %s104
      %p110 = scmp.eq.s32.totalorder %s27, 0
      %p111 = por %p109, %p110
      %p112 = scmp.ne.s32.totalorder %s101, %s104
      %p113 = scmp.eq.s32.totalorder %s32, 3
      %p114 = por %p112, %p113
      %p115 = scmp.ne.s32.totalorder %s104, %s105
      %p116 = scmp.eq.s32.totalorder %s32, 0
      %p117 = por %p115, %p116
      %p118 = scmp.ne.s32.totalorder %s104, %s105
      %p119 = scmp.eq.s32.totalorder %s33, 3
      %p120 = por %p118, %p119
      %p122 = scmp.ne.s32.totalorder %s105, %s121
      %p123 = scmp.eq.s32.totalorder %s33, 0
      %p124 = por %p122, %p123
      %s126 = sadd.s32 %s125, 1
      %p129 = scmp.eq.s32.totalorder %s27, 3
      %p130 = scmp.ne.s32.totalorder %s125, %s127
      %p131 = scmp.eq.s32.totalorder %s27, 0
      %p132 = por %p130, %p131
      %p133 = scmp.ne.s32.totalorder %s125, %s127
      %p134 = scmp.eq.s32.totalorder %s32, 3
      %p135 = por %p133, %p134
      %p136 = scmp.ne.s32.totalorder %s127, %s128
      %p137 = scmp.eq.s32.totalorder %s32, 0
      %p138 = por %p136, %p137
      %p139 = scmp.ne.s32.totalorder %s127, %s128
      %p140 = scmp.eq.s32.totalorder %s33, 3
      %p141 = por %p139, %p140
      %p143 = scmp.ne.s32.totalorder %s128, %s142
      %p144 = scmp.eq.s32.totalorder %s33, 0
      %p145 = por %p143, %p144
      %s147 = sadd.s32 %s146, 1
      %p150 = scmp.eq.s32.totalorder %s27, 3
      %p151 = scmp.ne.s32.totalorder %s146, %s148
      %p152 = scmp.eq.s32.totalorder %s27, 0
      %p153 = por %p151, %p152
      %p154 = scmp.ne.s32.totalorder %s146, %s148
      %p155 = scmp.eq.s32.totalorder %s32, 3
      %p156 = por %p154, %p155
      %p157 = scmp.ne.s32.totalorder %s148, %s149
      %p158 = scmp.eq.s32.totalorder %s32, 0
      %p159 = por %p157, %p158
      %p160 = scmp.ne.s32.totalorder %s148, %s149
      %p161 = scmp.eq.s32.totalorder %s33, 3
      %p162 = por %p160, %p161
      %p164 = scmp.ne.s32.totalorder %s149, %s163
      %p165 = scmp.eq.s32.totalorder %s33, 0
      %p166 = por %p164, %p165
      %s168 = sadd.s32 %s167, 1
      %p171 = scmp.eq.s32.totalorder %s27, 3
      %p172 = scmp.ne.s32.totalorder %s167, %s169
      %p173 = scmp.eq.s32.totalorder %s27, 0
      %p174 = por %p172, %p173
      %p175 = scmp.ne.s32.totalorder %s167, %s169
      %p176 = scmp.eq.s32.totalorder %s32, 3
      %p177 = por %p175, %p176
      %p178 = scmp.ne.s32.totalorder %s169, %s170
      %p179 = scmp.eq.s32.totalorder %s32, 0
      %p180 = por %p178, %p179
      %p181 = scmp.ne.s32.totalorder %s169, %s170
      %p182 = scmp.eq.s32.totalorder %s33, 3
      %p183 = por %p181, %p182
      %p185 = scmp.ne.s32.totalorder %s170, %s184
      %p186 = scmp.eq.s32.totalorder %s33, 0
      %p187 = por %p185, %p186
      %s188 = ssub.s32 %s34, %s46
      %p189 = scmp.eq.s32.totalorder %s188, 0
      %s191 = sadd.s32 %s190, 1
      %s192 = scalar_select %p189, %s190, %s191
      %p195 = pneg %p189
      %p196 = scmp.eq.s32.totalorder %s27, 3
      %p197 = por %p195, %p196
      %p198 = scmp.ne.s32.totalorder %s190, %s193
      %p199 = scmp.eq.s32.totalorder %s27, 0
      %p200 = por %p198, %p199
      %p201 = scmp.ne.s32.totalorder %s190, %s193
      %p202 = scmp.eq.s32.totalorder %s32, 3
      %p203 = por %p201, %p202
      %p204 = scmp.ne.s32.totalorder %s193, %s194
      %p205 = scmp.eq.s32.totalorder %s32, 0
      %p206 = por %p204, %p205
      %p207 = scmp.ne.s32.totalorder %s193, %s194
      %p208 = scmp.eq.s32.totalorder %s33, 3
      %p209 = por %p207, %p208
      %p211 = scmp.ne.s32.totalorder %s194, %s210
      %p212 = scmp.eq.s32.totalorder %s33, 0
      %p213 = por %p211, %p212
      %s214 = ssub.s32 %s34, %s46
      %p215 = scmp.eq.s32.totalorder %s214, 0
      %s217 = sadd.s32 %s216, 1
      %s218 = scalar_select %p215, %s216, %s217
      %p221 = pneg %p215
      %p222 = scmp.eq.s32.totalorder %s27, 3
      %p223 = por %p221, %p222
      %p224 = scmp.ne.s32.totalorder %s216, %s219
      %p225 = scmp.eq.s32.totalorder %s27, 0
      %p226 = por %p224, %p225
      %p227 = scmp.ne.s32.totalorder %s216, %s219
      %p228 = scmp.eq.s32.totalorder %s32, 3
      %p229 = por %p227, %p228
      %p230 = scmp.ne.s32.totalorder %s219, %s220
      %p231 = scmp.eq.s32.totalorder %s32, 0
      %p232 = por %p230, %p231
      %p233 = scmp.ne.s32.totalorder %s219, %s220
      %p234 = scmp.eq.s32.totalorder %s33, 3
      %p235 = por %p233, %p234
      %p237 = scmp.ne.s32.totalorder %s220, %s236
      %p238 = scmp.eq.s32.totalorder %s33, 0
      %p239 = por %p237, %p238
      %s240 = ssub.s32 %s34, %s46
      %s241 = ssub.s32 %s35, %s42
      %s242 = sor.u32 %s240, %s241
      %p243 = scmp.eq.s32.totalorder %s242, 0
      %s245 = sadd.s32 %s244, 1
      %s246 = scalar_select %p243, %s244, %s245
      %p249 = pneg %p243
      %p250 = scmp.eq.s32.totalorder %s27, 3
      %p251 = por %p249, %p250
      %p252 = scmp.ne.s32.totalorder %s244, %s247
      %p253 = scmp.eq.s32.totalorder %s27, 0
      %p254 = por %p252, %p253
      %p255 = scmp.ne.s32.totalorder %s244, %s247
      %p256 = scmp.eq.s32.totalorder %s32, 3
      %p257 = por %p255, %p256
      %p258 = scmp.ne.s32.totalorder %s247, %s248
      %p259 = scmp.eq.s32.totalorder %s32, 0
      %p260 = por %p258, %p259
      %p261 = scmp.ne.s32.totalorder %s247, %s248
      %p262 = scmp.eq.s32.totalorder %s33, 3
      %p263 = por %p261, %p262
      %p265 = scmp.ne.s32.totalorder %s248, %s264
      %p266 = scmp.eq.s32.totalorder %s33, 0
      %p267 = por %p265, %p266
      %p268 = scmp.le.s32.totalorder 1, %s27
      %p269 = scmp.lt.s32.totalorder %s27, 5
      %p270 = pnand %p268, %p269
      %p271 = pneg %p270
      // Predicated region
      $region9: #{tpu_custom_call.1} parent=5 // pred_check
        _
      $region10: #{tpu_custom_call.1} parent=5 // pred_check_branch
        %273 = sbr.rel (%p270) target = $region12
      $region11: #{tpu_custom_call.1} parent=5 // pred_region
        %s274 = ssub.s32 %s27, 1
        // Predicated region
        $region13: #{tpu_custom_call.1} parent=11 // pred_check
          %p275 = pneg %p138
        $region14: #{tpu_custom_call.1} parent=11 // pred_check_branch
          %277 = sbr.rel (%p275) target = $region16
        $region15: #{tpu_custom_call.1} parent=11 // pred_region
          %s279 = ssub.s32 128, 128
          %280 = vsyncadd [#allocation6], %s279
          %s282 = sshll.u32 [#allocation7], 4
          %s283 = int_to_ptr.vmem [resolvable:$true] %s282
          %285 = dma.hbm_to_vmem [thread:$0]  %s3, 128, %s283, [#allocation6]
        $region16: #{tpu_custom_call.1} parent=11 // pred_fallthru
          _
        // Predicated region
        $region17: #{tpu_custom_call.1} parent=11 // pred_check
          %p286 = pneg %p159
        $region18: #{tpu_custom_call.1} parent=11 // pred_check_branch
          %288 = sbr.rel (%p286) target = $region20
        $region19: #{tpu_custom_call.1} parent=11 // pred_region
          %s290 = ssub.s32 128, 128
          %291 = vsyncadd [#allocation9], %s290
          %s293 = sshll.u32 [#allocation8], 4
          %s294 = int_to_ptr.vmem [resolvable:$true] %s293
          %296 = dma.hbm_to_vmem [thread:$0]  %s4, 128, %s294, [#allocation9]
        $region20: #{tpu_custom_call.1} parent=11 // pred_fallthru
          _
        // Predicated region
        $region21: #{tpu_custom_call.1} parent=11 // pred_check
          %p297 = pneg %p180
        $region22: #{tpu_custom_call.1} parent=11 // pred_check_branch
          %299 = sbr.rel (%p297) target = $region24
        $region23: #{tpu_custom_call.1} parent=11 // pred_region
          %s301 = ssub.s32 512, 512
          %302 = vsyncadd [#allocation9], %s301
          %s303 = sshll.u32 [#allocation10], 4
          %s304 = int_to_ptr.vmem [resolvable:$true] %s303
          %309 = dma.hbm_to_vmem [thread:$0]  %s5, 512, %s304, [#allocation9], 128, 128, 8
        $region24: #{tpu_custom_call.1} parent=11 // pred_fallthru
          _
      $region12: #{tpu_custom_call.1} parent=5 // pred_fallthru
        _
      %p310 = scmp.lt.s32.totalorder %s27, 4
      // Predicated region
      $region25: #{tpu_custom_call.1} parent=5 // pred_check
        %p311 = pneg %p310
      $region26: #{tpu_custom_call.1} parent=5 // pred_check_branch
        %313 = sbr.rel (%p311) target = $region28
      $region27: #{tpu_custom_call.1} parent=5 // pred_region
        // Predicated region
        $region29: #{tpu_custom_call.1} parent=27 // pred_check
          %p314 = pneg %p59
        $region30: #{tpu_custom_call.1} parent=27 // pred_check_branch
          %316 = sbr.rel (%p314) target = $region32
        $region31: #{tpu_custom_call.1} parent=27 // pred_region
          %s317 = sand.u32 %s49, 1
          %s318 = scalar_lea.sflag [#allocation3], %s317
          %s319 = sand.u32 %s49, 1
          %s320 = smul.addr %s319, 8
          %s321 = scalar_lea.vmem [#allocation2], %s320
          %s323 = ssub.s32 128, 128
          %324 = vsyncadd %s318, %s323
          %s325 = smul.addr %s34, 128
          %s326 = scalar_lea.hbm %s0, %s325
          %s328 = sshll.u32 %s321, 4
          %s329 = int_to_ptr.vmem [resolvable:$true] %s328
          %331 = dma.hbm_to_vmem [thread:$0]  %s326, 128, %s329, %s318
        $region32: #{tpu_custom_call.1} parent=27 // pred_fallthru
          _
        // Predicated region
        $region33: #{tpu_custom_call.1} parent=27 // pred_check
          %p332 = pneg %p85
        $region34: #{tpu_custom_call.1} parent=27 // pred_check_branch
          %334 = sbr.rel (%p332) target = $region36
        $region35: #{tpu_custom_call.1} parent=27 // pred_region
          %s335 = sand.u32 %s27, 1
          %s336 = scalar_lea.sflag [#allocation6], %s335
          %s337 = sand.u32 %s75, 1
          %s338 = smul.addr %s337, 32
          %s339 = scalar_lea.vmem [#allocation5], %s338
          %s341 = ssub.s32 512, 512
          %342 = vsyncadd %s336, %s341
          %s343 = smul.addr %s35, 4
          %s344 = smul.addr %s343, 128
          %s345 = scalar_lea.hbm %s1, %s344
          %s346 = sshll.u32 %s339, 4
          %s347 = int_to_ptr.vmem [resolvable:$true] %s346
          %352 = dma.hbm_to_vmem [thread:$0]  %s345, 512, %s347, %s336, 128, 128, 8
        $region36: #{tpu_custom_call.1} parent=27 // pred_fallthru
          _
        // Predicated region
        $region37: #{tpu_custom_call.1} parent=27 // pred_check
          %p353 = pneg %p111
        $region38: #{tpu_custom_call.1} parent=27 // pred_check_branch
          %355 = sbr.rel (%p353) target = $region40
        $region39: #{tpu_custom_call.1} parent=27 // pred_region
          %p356 = scmp.lt.s32.totalorder %s35, 1
          %s357 = scalar_select %p356, %s35, 1
          %s358 = scalar_lea.vmem %s2, %s357
        $region40: #{tpu_custom_call.1} parent=27 // pred_fallthru
          _
        // Predicated region
        $region41: #{tpu_custom_call.1} parent=27 // pred_check
          %p359 = pneg %p200
        $region42: #{tpu_custom_call.1} parent=27 // pred_check_branch
          %361 = sbr.rel (%p359) target = $region44
        $region43: #{tpu_custom_call.1} parent=27 // pred_region
          %p362 = scmp.lt.s32.totalorder %s34, 1
          %s363 = scalar_select %p362, %s34, 1
          %s364 = smul.addr %s363, 8
          %s365 = scalar_lea.vmem %s6, %s364
        $region44: #{tpu_custom_call.1} parent=27 // pred_fallthru
          _
        // Predicated region
        $region45: #{tpu_custom_call.1} parent=27 // pred_check
          %p366 = pneg %p226
        $region46: #{tpu_custom_call.1} parent=27 // pred_check_branch
          %368 = sbr.rel (%p366) target = $region48
        $region47: #{tpu_custom_call.1} parent=27 // pred_region
          %s369 = sand.u32 %s216, 1
          %s370 = scalar_lea.sflag [#allocation12], %s369
          %s371 = sand.u32 %s216, 1
          %s372 = smul.addr %s371, 8
          %s373 = scalar_lea.vmem [#allocation11], %s372
          %s375 = ssub.s32 128, 128
          %376 = vsyncadd %s370, %s375
          %s377 = smul.addr %s34, 128
          %s378 = scalar_lea.hbm %s7, %s377
          %s380 = sshll.u32 %s373, 4
          %s381 = int_to_ptr.vmem [resolvable:$true] %s380
          %383 = dma.hbm_to_vmem [thread:$0]  %s378, 128, %s381, %s370
        $region48: #{tpu_custom_call.1} parent=27 // pred_fallthru
          _
      $region28: #{tpu_custom_call.1} parent=5 // pred_fallthru
        _
      %p384 = scmp.le.s32.totalorder 1, %s27
      %p385 = scmp.lt.s32.totalorder %s27, 5
      %p386 = pnand %p384, %p385
      %p387 = pneg %p386
      // Predicated region
      $region49: #{tpu_custom_call.1} parent=5 // pred_check
        _
      $region50: #{tpu_custom_call.1} parent=5 // pred_check_branch
        %389 = sbr.rel (%p386) target = $region52
      $region51: #{tpu_custom_call.1} parent=5 // pred_region
        %s390 = ssub.s32 %s27, 1
        %s391 = sand.u32 %s52, 1
        %s392 = scalar_lea.sflag [#allocation3], %s391
        %s393 = sand.u32 %s52, 1
        %s394 = smul.addr %s393, 8
        %s395 = scalar_lea.vmem [#allocation2], %s394
        // Predicated region
        $region53: #{tpu_custom_call.1} parent=51 // pred_check
          %p396 = pneg %p65
        $region54: #{tpu_custom_call.1} parent=51 // pred_check_branch
          %398 = sbr.rel (%p396) target = $region56
        $region55: #{tpu_custom_call.1} parent=51 // pred_region
          %399 = dma.done %s392, 128
        $region56: #{tpu_custom_call.1} parent=51 // pred_fallthru
          _
        %s400 = sand.u32 %s32, 1
        %s401 = scalar_lea.sflag [#allocation6], %s400
        %s402 = sand.u32 %s78, 1
        %s403 = smul.addr %s402, 32
        %s404 = scalar_lea.vmem [#allocation5], %s403
        // Predicated region
        $region57: #{tpu_custom_call.1} parent=51 // pred_check
          %p405 = pneg %p91
        $region58: #{tpu_custom_call.1} parent=51 // pred_check_branch
          %407 = sbr.rel (%p405) target = $region60
        $region59: #{tpu_custom_call.1} parent=51 // pred_region
          %408 = dma.done %s401, 512
        $region60: #{tpu_custom_call.1} parent=51 // pred_fallthru
          _
        // Predicated region
        $region61: #{tpu_custom_call.1} parent=51 // pred_check
          %p409 = pneg %p138
        $region62: #{tpu_custom_call.1} parent=51 // pred_check_branch
          %411 = sbr.rel (%p409) target = $region64
        $region63: #{tpu_custom_call.1} parent=51 // pred_region
          %412 = dma.done [#allocation6], 128
        $region64: #{tpu_custom_call.1} parent=51 // pred_fallthru
          _
        // Predicated region
        $region65: #{tpu_custom_call.1} parent=51 // pred_check
          %p413 = pneg %p159
        $region66: #{tpu_custom_call.1} parent=51 // pred_check_branch
          %415 = sbr.rel (%p413) target = $region68
        $region67: #{tpu_custom_call.1} parent=51 // pred_region
          %416 = dma.done [#allocation9], 128
        $region68: #{tpu_custom_call.1} parent=51 // pred_fallthru
          _
        // Predicated region
        $region69: #{tpu_custom_call.1} parent=51 // pred_check
          %p417 = pneg %p180
        $region70: #{tpu_custom_call.1} parent=51 // pred_check_branch
          %419 = sbr.rel (%p417) target = $region72
        $region71: #{tpu_custom_call.1} parent=51 // pred_region
          %420 = dma.done [#allocation9], 512
        $region72: #{tpu_custom_call.1} parent=51 // pred_fallthru
          _
        %s421 = sand.u32 %s219, 1
        %s422 = scalar_lea.sflag [#allocation12], %s421
        %s423 = sand.u32 %s219, 1
        %s424 = smul.addr %s423, 8
        %s425 = scalar_lea.vmem [#allocation11], %s424
        // Predicated region
        $region73: #{tpu_custom_call.1} parent=51 // pred_check
          %p426 = pneg %p232
        $region74: #{tpu_custom_call.1} parent=51 // pred_check_branch
          %428 = sbr.rel (%p426) target = $region76
        $region75: #{tpu_custom_call.1} parent=51 // pred_region
          %429 = dma.done %s422, 128
        $region76: #{tpu_custom_call.1} parent=51 // pred_fallthru
          _
        %s430 = sand.u32 %s52, 1
        %s431 = scalar_lea.sflag [#allocation3], %s430
        %s432 = sand.u32 %s52, 1
        %s433 = smul.addr %s432, 8
        %s434 = scalar_lea.vmem [#allocation2], %s433
        %p435 = pneg %p65
        %p436 = pneg %p62
        %s437 = sand.u32 %s32, 1
        %s438 = scalar_lea.sflag [#allocation6], %s437
        %s439 = sand.u32 %s78, 1
        %s440 = smul.addr %s439, 32
        %s441 = scalar_lea.vmem [#allocation5], %s440
        %p442 = pneg %p91
        %p443 = pneg %p88
        %p444 = scmp.lt.s32.totalorder %s37, 1
        %s445 = scalar_select %p444, %s37, 1
        %s446 = scalar_lea.vmem %s2, %s445
        %p447 = pneg %p117
        %p448 = pneg %p114
        %p449 = pneg %p138
        %p450 = pneg %p135
        %p451 = pneg %p159
        %p452 = pneg %p156
        %p453 = pneg %p180
        %p454 = pneg %p177
        %p455 = scmp.lt.s32.totalorder %s36, 1
        %s456 = scalar_select %p455, %s36, 1
        %s457 = smul.addr %s456, 8
        %s458 = scalar_lea.vmem %s6, %s457
        %p459 = pneg %p206
        %p460 = pneg %p203
        %s461 = sand.u32 %s219, 1
        %s462 = scalar_lea.sflag [#allocation12], %s461
        %s463 = sand.u32 %s219, 1
        %s464 = smul.addr %s463, 8
        %s465 = scalar_lea.vmem [#allocation11], %s464
        %p466 = pneg %p232
        %p467 = pneg %p229
        %p468 = pneg %p260
        %p469 = pneg %p257
        %s470 = sand.u32 %s247, 1
        %s471 = scalar_lea.sflag [#allocation4], %s470
        %s472 = sand.u32 %s247, 1
        %s473 = smul.addr %s472, 8
        %s474 = scalar_lea.vmem [#allocation13], %s473
        %p475 = scmp.lt.s32.totalorder %s37, 1
        %s476 = scalar_select %p475, %s37, 1
        %s477 = scalar_lea.vmem %s2, %s476
        %p478 = scmp.lt.s32.totalorder %s36, 1
        %s479 = scalar_select %p478, %s36, 1
        %s480 = smul.addr %s479, 8
        %s481 = scalar_lea.vmem %s6, %s480
        %v482 = vld [vmem:[%s395] sm:$0xff]
        %v483 = vld [vmem:[%s404] sm:$0xff]
        %v484 = vld [vmem:[%s404 + $0x8] sm:$0xff]
        %v485 = vld [vmem:[%s404 + $0x10] sm:$0xff]
        %v486 = vld [vmem:[%s404 + $0x18] sm:$0xff]
        %v487 = vld [vmem:[%s477] sm:$0x1]
        %v489 = vlaneseq
        %v490 = vshrl.u32 %v489, 7
        %v491 = vsub.s32 0, %v490
        %v492 = vrot.slane %v487, %v491
        %vm494 = vcmask 261120
        %v496 = vsel %vm494, %v482, 0
        %498 = vmatprep.subr.mxu0 0.0
        %v499 = vand.u32 %v483, 4294901760
        %500 = vmatpush1.msra.mxu0 %v499
        %501 = vmatprep.subr.mxu0 0.0
        %v502 = vand.u32 %v484, 4294901760
        %503 = vmatpush1.msra.mxu0 %v502
        %504 = vmatprep.subr.mxu0 0.0
        %v505 = vand.u32 %v485, 4294901760
        %506 = vmatpush1.msra.mxu0 %v505
        %507 = vmatprep.subr.mxu0 0.0
        %v508 = vand.u32 %v486, 4294901760
        %509 = vmatpush1.msra.mxu0 %v508
        %510 = vmatprep.subr.mxu0 0.0
        %511 = vmatpush1.msra.mxu0 0.0
        %512 = vmatprep.subr.mxu0 0.0
        %513 = vmatpush1.msra.mxu0 0.0
        %514 = vmatprep.subr.mxu0 0.0
        %515 = vmatpush1.msra.mxu0 0.0
        %516 = vmatprep.subr.mxu0 0.0
        %517 = vmatpush1.msra.mxu0 0.0
        %518 = vmatprep.subr.mxu0 0.0
        %519 = vmatpush1.msra.mxu0 0.0
        %520 = vmatprep.subr.mxu0 0.0
        %521 = vmatpush1.msra.mxu0 0.0
        %522 = vmatprep.subr.mxu0 0.0
        %523 = vmatpush1.msra.mxu0 0.0
        %524 = vmatprep.subr.mxu0 0.0
        %525 = vmatpush1.msra.mxu0 0.0
        %526 = vmatprep.subr.mxu0 0.0
        %527 = vmatpush1.msra.mxu0 0.0
        %528 = vmatprep.subr.mxu0 0.0
        %529 = vmatpush1.msra.mxu0 0.0
        %530 = vmatprep.subr.mxu0 0.0
        %531 = vmatpush1.msra.mxu0 0.0
        %532 = vmatprep.subr.mxu0 0.0
        %533 = vmatpush1.msra.mxu0 0.0
        %534 = vmatprep.subr.mxu0 0.0
        %535 = vmatpush1.msra.mxu0 0.0
        %536 = vmatprep.subr.mxu0 0.0
        %537 = vmatpush1.msra.mxu0 0.0
        %538 = vmatprep.subr.mxu0 0.0
        %539 = vmatpush1.msra.mxu0 0.0
        %540 = vmatprep.subr.mxu0 0.0
        %541 = vmatpush1.msra.mxu0 0.0
        %542 = vmatprep.subr.mxu0 0.0
        %543 = vmatpush1.msra.mxu0 0.0
        %544 = vmatprep.subr.mxu0 0.0
        %545 = vmatpush1.msra.mxu0 0.0
        %546 = vmatprep.subr.mxu0 0.0
        %547 = vmatpush1.msra.mxu0 0.0
        %548 = vmatprep.subr.mxu0 0.0
        %549 = vmatpush1.msra.mxu0 0.0
        %550 = vmatprep.subr.mxu0 0.0
        %551 = vmatpush1.msra.mxu0 0.0
        %552 = vmatprep.subr.mxu0 0.0
        %553 = vmatpush1.msra.mxu0 0.0
        %554 = vmatprep.subr.mxu0 0.0
        %555 = vmatpush1.msra.mxu0 0.0
        %556 = vmatprep.subr.mxu0 0.0
        %557 = vmatpush1.msra.mxu0 0.0
        %558 = vmatprep.subr.mxu0 0.0
        %559 = vmatpush1.msra.mxu0 0.0
        %560 = vmatprep.subr.mxu0 0.0
        %561 = vmatpush1.msra.mxu0 0.0
        %562 = vmatprep.subr.mxu0 0.0
        %563 = vmatpush1.msra.mxu0 0.0
        %564 = vmatprep.subr.mxu0 0.0
        %565 = vmatpush1.msra.mxu0 0.0
        %566 = vmatprep.mubr.f32.mxu0 0.0
        %v567 = vand.u32 %v496, 4294901760
        %v568 = vsub.f32 %v496, %v567
        %v569 = vand.u32 %v568, 4294901760
        %v570 = vsub.f32 %v568, %v569
        %v571 = vand.u32 %v570, 4294901760
        %572 = vmatmul.mubr.f32.gmra.mrb[0].mxu0 %v571
        %v573 = vpop.f32.mrb[0].mxu0
        %v574 = vadd.f32 %v492, %v573
        %v575 = vpop.f32.mrb[0].mxu0
        %576 = vdwg.mxu0
        %577 = vmatprep.subr.mxu0 0.0
        %v578 = vand.u32 %v483, 4294901760
        %v579 = vsub.f32 %v483, %v578
        %v580 = vand.u32 %v579, 4294901760
        %v581 = vsub.f32 %v579, %v580
        %v582 = vand.u32 %v581, 4294901760
        %583 = vmatpush1.msra.mxu0 %v582
        %584 = vmatprep.subr.mxu0 0.0
        %v585 = vand.u32 %v484, 4294901760
        %v586 = vsub.f32 %v484, %v585
        %v587 = vand.u32 %v586, 4294901760
        %v588 = vsub.f32 %v586, %v587
        %v589 = vand.u32 %v588, 4294901760
        %590 = vmatpush1.msra.mxu0 %v589
        %591 = vmatprep.subr.mxu0 0.0
        %v592 = vand.u32 %v485, 4294901760
        %v593 = vsub.f32 %v485, %v592
        %v594 = vand.u32 %v593, 4294901760
        %v595 = vsub.f32 %v593, %v594
        %v596 = vand.u32 %v595, 4294901760
        %597 = vmatpush1.msra.mxu0 %v596
        %598 = vmatprep.subr.mxu0 0.0
        %v599 = vand.u32 %v486, 4294901760
        %v600 = vsub.f32 %v486, %v599
        %v601 = vand.u32 %v600, 4294901760
        %v602 = vsub.f32 %v600, %v601
        %v603 = vand.u32 %v602, 4294901760
        %604 = vmatpush1.msra.mxu0 %v603
        %605 = vmatprep.subr.mxu0 0.0
        %606 = vmatpush1.msra.mxu0 0.0
        %607 = vmatprep.subr.mxu0 0.0
        %608 = vmatpush1.msra.mxu0 0.0
        %609 = vmatprep.subr.mxu0 0.0
        %610 = vmatpush1.msra.mxu0 0.0
        %611 = vmatprep.subr.mxu0 0.0
        %612 = vmatpush1.msra.mxu0 0.0
        %613 = vmatprep.subr.mxu0 0.0
        %614 = vmatpush1.msra.mxu0 0.0
        %615 = vmatprep.subr.mxu0 0.0
        %616 = vmatpush1.msra.mxu0 0.0
        %617 = vmatprep.subr.mxu0 0.0
        %618 = vmatpush1.msra.mxu0 0.0
        %619 = vmatprep.subr.mxu0 0.0
        %620 = vmatpush1.msra.mxu0 0.0
        %621 = vmatprep.subr.mxu0 0.0
        %622 = vmatpush1.msra.mxu0 0.0
        %623 = vmatprep.subr.mxu0 0.0
        %624 = vmatpush1.msra.mxu0 0.0
        %625 = vmatprep.subr.mxu0 0.0
        %626 = vmatpush1.msra.mxu0 0.0
        %627 = vmatprep.subr.mxu0 0.0
        %628 = vmatpush1.msra.mxu0 0.0
        %629 = vmatprep.subr.mxu0 0.0
        %630 = vmatpush1.msra.mxu0 0.0
        %631 = vmatprep.subr.mxu0 0.0
        %632 = vmatpush1.msra.mxu0 0.0
        %633 = vmatprep.subr.mxu0 0.0
        %634 = vmatpush1.msra.mxu0 0.0
        %635 = vmatprep.subr.mxu0 0.0
        %636 = vmatpush1.msra.mxu0 0.0
        %637 = vmatprep.subr.mxu0 0.0
        %638 = vmatpush1.msra.mxu0 0.0
        %639 = vmatprep.subr.mxu0 0.0
        %640 = vmatpush1.msra.mxu0 0.0
        %641 = vmatprep.subr.mxu0 0.0
        %642 = vmatpush1.msra.mxu0 0.0
        %643 = vmatprep.subr.mxu0 0.0
        %644 = vmatpush1.msra.mxu0 0.0
        %645 = vmatprep.subr.mxu0 0.0
        %646 = vmatpush1.msra.mxu0 0.0
        %647 = vmatprep.subr.mxu0 0.0
        %648 = vmatpush1.msra.mxu0 0.0
        %649 = vmatprep.subr.mxu0 0.0
        %650 = vmatpush1.msra.mxu0 0.0
        %651 = vmatprep.subr.mxu0 0.0
        %652 = vmatpush1.msra.mxu0 0.0
        %653 = vmatprep.subr.mxu0 0.0
        %654 = vmatpush1.msra.mxu0 0.0
        %655 = vmatprep.subr.mxu0 0.0
        %656 = vmatpush1.msra.mxu0 0.0
        %657 = vmatprep.subr.mxu0 0.0
        %658 = vmatpush1.msra.mxu0 0.0
        %659 = vmatprep.subr.mxu0 0.0
        %660 = vmatpush1.msra.mxu0 0.0
        %661 = vmatprep.mubr.f32.mxu0 0.0
        %v662 = vand.u32 %v496, 4294901760
        %663 = vmatmul.mubr.f32.gmra.mrb[0].mxu0 %v662
        %v664 = vpop.f32.mrb[0].mxu0
        %v665 = vadd.f32 %v574, %v664
        %v666 = vpop.f32.mrb[0].mxu0
        %667 = vdwg.mxu0
        %668 = vmatprep.subr.mxu0 0.0
        %v669 = vand.u32 %v483, 4294901760
        %v670 = vsub.f32 %v483, %v669
        %671 = vmatpush1.msra.mxu0 %v670
        %672 = vmatprep.subr.mxu0 0.0
        %v673 = vand.u32 %v484, 4294901760
        %v674 = vsub.f32 %v484, %v673
        %675 = vmatpush1.msra.mxu0 %v674
        %676 = vmatprep.subr.mxu0 0.0
        %v677 = vand.u32 %v485, 4294901760
        %v678 = vsub.f32 %v485, %v677
        %679 = vmatpush1.msra.mxu0 %v678
        %680 = vmatprep.subr.mxu0 0.0
        %v681 = vand.u32 %v486, 4294901760
        %v682 = vsub.f32 %v486, %v681
        %683 = vmatpush1.msra.mxu0 %v682
        %684 = vmatprep.subr.mxu0 0.0
        %685 = vmatpush1.msra.mxu0 0.0
        %686 = vmatprep.subr.mxu0 0.0
        %687 = vmatpush1.msra.mxu0 0.0
        %688 = vmatprep.subr.mxu0 0.0
        %689 = vmatpush1.msra.mxu0 0.0
        %690 = vmatprep.subr.mxu0 0.0
        %691 = vmatpush1.msra.mxu0 0.0
        %692 = vmatprep.subr.mxu0 0.0
        %693 = vmatpush1.msra.mxu0 0.0
        %694 = vmatprep.subr.mxu0 0.0
        %695 = vmatpush1.msra.mxu0 0.0
        %696 = vmatprep.subr.mxu0 0.0
        %697 = vmatpush1.msra.mxu0 0.0
        %698 = vmatprep.subr.mxu0 0.0
        %699 = vmatpush1.msra.mxu0 0.0
        %700 = vmatprep.subr.mxu0 0.0
        %701 = vmatpush1.msra.mxu0 0.0
        %702 = vmatprep.subr.mxu0 0.0
        %703 = vmatpush1.msra.mxu0 0.0
        %704 = vmatprep.subr.mxu0 0.0
        %705 = vmatpush1.msra.mxu0 0.0
        %706 = vmatprep.subr.mxu0 0.0
        %707 = vmatpush1.msra.mxu0 0.0
        %708 = vmatprep.subr.mxu0 0.0
        %709 = vmatpush1.msra.mxu0 0.0
        %710 = vmatprep.subr.mxu0 0.0
        %711 = vmatpush1.msra.mxu0 0.0
        %712 = vmatprep.subr.mxu0 0.0
        %713 = vmatpush1.msra.mxu0 0.0
        %714 = vmatprep.subr.mxu0 0.0
        %715 = vmatpush1.msra.mxu0 0.0
        %716 = vmatprep.subr.mxu0 0.0
        %717 = vmatpush1.msra.mxu0 0.0
        %718 = vmatprep.subr.mxu0 0.0
        %719 = vmatpush1.msra.mxu0 0.0
        %720 = vmatprep.subr.mxu0 0.0
        %721 = vmatpush1.msra.mxu0 0.0
        %722 = vmatprep.subr.mxu0 0.0
        %723 = vmatpush1.msra.mxu0 0.0
        %724 = vmatprep.subr.mxu0 0.0
        %725 = vmatpush1.msra.mxu0 0.0
        %726 = vmatprep.subr.mxu0 0.0
        %727 = vmatpush1.msra.mxu0 0.0
        %728 = vmatprep.subr.mxu0 0.0
        %729 = vmatpush1.msra.mxu0 0.0
        %730 = vmatprep.subr.mxu0 0.0
        %731 = vmatpush1.msra.mxu0 0.0
        %732 = vmatprep.subr.mxu0 0.0
        %733 = vmatpush1.msra.mxu0 0.0
        %734 = vmatprep.subr.mxu0 0.0
        %735 = vmatpush1.msra.mxu0 0.0
        %736 = vmatprep.subr.mxu0 0.0
        %737 = vmatpush1.msra.mxu0 0.0
        %738 = vmatprep.subr.mxu0 0.0
        %739 = vmatpush1.msra.mxu0 0.0
        %740 = vmatprep.mubr.f32.mxu0 0.0
        %v741 = vand.u32 %v496, 4294901760
        %v742 = vsub.f32 %v496, %v741
        %743 = vmatmul.mubr.f32.gmra.mrb[0].mxu0 %v742
        %v744 = vpop.f32.mrb[0].mxu0
        %v745 = vadd.f32 %v665, %v744
        %v746 = vpop.f32.mrb[0].mxu0
        %747 = vdwg.mxu0
        %748 = vmatprep.subr.mxu0 0.0
        %v749 = vand.u32 %v483, 4294901760
        %750 = vmatpush1.msra.mxu0 %v749
        %751 = vmatprep.subr.mxu0 0.0
        %v752 = vand.u32 %v484, 4294901760
        %753 = vmatpush1.msra.mxu0 %v752
        %754 = vmatprep.subr.mxu0 0.0
        %v755 = vand.u32 %v485, 4294901760
        %756 = vmatpush1.msra.mxu0 %v755
        %757 = vmatprep.subr.mxu0 0.0
        %v758 = vand.u32 %v486, 4294901760
        %759 = vmatpush1.msra.mxu0 %v758
        %760 = vmatprep.subr.mxu0 0.0
        %761 = vmatpush1.msra.mxu0 0.0
        %762 = vmatprep.subr.mxu0 0.0
        %763 = vmatpush1.msra.mxu0 0.0
        %764 = vmatprep.subr.mxu0 0.0
        %765 = vmatpush1.msra.mxu0 0.0
        %766 = vmatprep.subr.mxu0 0.0
        %767 = vmatpush1.msra.mxu0 0.0
        %768 = vmatprep.subr.mxu0 0.0
        %769 = vmatpush1.msra.mxu0 0.0
        %770 = vmatprep.subr.mxu0 0.0
        %771 = vmatpush1.msra.mxu0 0.0
        %772 = vmatprep.subr.mxu0 0.0
        %773 = vmatpush1.msra.mxu0 0.0
        %774 = vmatprep.subr.mxu0 0.0
        %775 = vmatpush1.msra.mxu0 0.0
        %776 = vmatprep.subr.mxu0 0.0
        %777 = vmatpush1.msra.mxu0 0.0
        %778 = vmatprep.subr.mxu0 0.0
        %779 = vmatpush1.msra.mxu0 0.0
        %780 = vmatprep.subr.mxu0 0.0
        %781 = vmatpush1.msra.mxu0 0.0
        %782 = vmatprep.subr.mxu0 0.0
        %783 = vmatpush1.msra.mxu0 0.0
        %784 = vmatprep.subr.mxu0 0.0
        %785 = vmatpush1.msra.mxu0 0.0
        %786 = vmatprep.subr.mxu0 0.0
        %787 = vmatpush1.msra.mxu0 0.0
        %788 = vmatprep.subr.mxu0 0.0
        %789 = vmatpush1.msra.mxu0 0.0
        %790 = vmatprep.subr.mxu0 0.0
        %791 = vmatpush1.msra.mxu0 0.0
        %792 = vmatprep.subr.mxu0 0.0
        %793 = vmatpush1.msra.mxu0 0.0
        %794 = vmatprep.subr.mxu0 0.0
        %795 = vmatpush1.msra.mxu0 0.0
        %796 = vmatprep.subr.mxu0 0.0
        %797 = vmatpush1.msra.mxu0 0.0
        %798 = vmatprep.subr.mxu0 0.0
        %799 = vmatpush1.msra.mxu0 0.0
        %800 = vmatprep.subr.mxu0 0.0
        %801 = vmatpush1.msra.mxu0 0.0
        %802 = vmatprep.subr.mxu0 0.0
        %803 = vmatpush1.msra.mxu0 0.0
        %804 = vmatprep.subr.mxu0 0.0
        %805 = vmatpush1.msra.mxu0 0.0
        %806 = vmatprep.subr.mxu0 0.0
        %807 = vmatpush1.msra.mxu0 0.0
        %808 = vmatprep.subr.mxu0 0.0
        %809 = vmatpush1.msra.mxu0 0.0
        %810 = vmatprep.subr.mxu0 0.0
        %811 = vmatpush1.msra.mxu0 0.0
        %812 = vmatprep.subr.mxu0 0.0
        %813 = vmatpush1.msra.mxu0 0.0
        %814 = vmatprep.subr.mxu0 0.0
        %815 = vmatpush1.msra.mxu0 0.0
        %816 = vmatprep.mubr.f32.mxu0 0.0
        %v817 = vand.u32 %v496, 4294901760
        %v818 = vsub.f32 %v496, %v817
        %v819 = vand.u32 %v818, 4294901760
        %820 = vmatmul.mubr.f32.gmra.mrb[0].mxu0 %v819
        %v821 = vpop.f32.mrb[0].mxu0
        %v822 = vadd.f32 %v745, %v821
        %v823 = vpop.f32.mrb[0].mxu0
        %824 = vdwg.mxu0
        %825 = vmatprep.subr.mxu0 0.0
        %v826 = vand.u32 %v483, 4294901760
        %v827 = vsub.f32 %v483, %v826
        %v828 = vand.u32 %v827, 4294901760
        %829 = vmatpush1.msra.mxu0 %v828
        %830 = vmatprep.subr.mxu0 0.0
        %v831 = vand.u32 %v484, 4294901760
        %v832 = vsub.f32 %v484, %v831
        %v833 = vand.u32 %v832, 4294901760
        %834 = vmatpush1.msra.mxu0 %v833
        %835 = vmatprep.subr.mxu0 0.0
        %v836 = vand.u32 %v485, 4294901760
        %v837 = vsub.f32 %v485, %v836
        %v838 = vand.u32 %v837, 4294901760
        %839 = vmatpush1.msra.mxu0 %v838
        %840 = vmatprep.subr.mxu0 0.0
        %v841 = vand.u32 %v486, 4294901760
        %v842 = vsub.f32 %v486, %v841
        %v843 = vand.u32 %v842, 4294901760
        %844 = vmatpush1.msra.mxu0 %v843
        %845 = vmatprep.subr.mxu0 0.0
        %846 = vmatpush1.msra.mxu0 0.0
        %847 = vmatprep.subr.mxu0 0.0
        %848 = vmatpush1.msra.mxu0 0.0
        %849 = vmatprep.subr.mxu0 0.0
        %850 = vmatpush1.msra.mxu0 0.0
        %851 = vmatprep.subr.mxu0 0.0
        %852 = vmatpush1.msra.mxu0 0.0
        %853 = vmatprep.subr.mxu0 0.0
        %854 = vmatpush1.msra.mxu0 0.0
        %855 = vmatprep.subr.mxu0 0.0
        %856 = vmatpush1.msra.mxu0 0.0
        %857 = vmatprep.subr.mxu0 0.0
        %858 = vmatpush1.msra.mxu0 0.0
        %859 = vmatprep.subr.mxu0 0.0
        %860 = vmatpush1.msra.mxu0 0.0
        %861 = vmatprep.subr.mxu0 0.0
        %862 = vmatpush1.msra.mxu0 0.0
        %863 = vmatprep.subr.mxu0 0.0
        %864 = vmatpush1.msra.mxu0 0.0
        %865 = vmatprep.subr.mxu0 0.0
        %866 = vmatpush1.msra.mxu0 0.0
        %867 = vmatprep.subr.mxu0 0.0
        %868 = vmatpush1.msra.mxu0 0.0
        %869 = vmatprep.subr.mxu0 0.0
        %870 = vmatpush1.msra.mxu0 0.0
        %871 = vmatprep.subr.mxu0 0.0
        %872 = vmatpush1.msra.mxu0 0.0
        %873 = vmatprep.subr.mxu0 0.0
        %874 = vmatpush1.msra.mxu0 0.0
        %875 = vmatprep.subr.mxu0 0.0
        %876 = vmatpush1.msra.mxu0 0.0
        %877 = vmatprep.subr.mxu0 0.0
        %878 = vmatpush1.msra.mxu0 0.0
        %879 = vmatprep.subr.mxu0 0.0
        %880 = vmatpush1.msra.mxu0 0.0
        %881 = vmatprep.subr.mxu0 0.0
        %882 = vmatpush1.msra.mxu0 0.0
        %883 = vmatprep.subr.mxu0 0.0
        %884 = vmatpush1.msra.mxu0 0.0
        %885 = vmatprep.subr.mxu0 0.0
        %886 = vmatpush1.msra.mxu0 0.0
        %887 = vmatprep.subr.mxu0 0.0
        %888 = vmatpush1.msra.mxu0 0.0
        %889 = vmatprep.subr.mxu0 0.0
        %890 = vmatpush1.msra.mxu0 0.0
        %891 = vmatprep.subr.mxu0 0.0
        %892 = vmatpush1.msra.mxu0 0.0
        %893 = vmatprep.subr.mxu0 0.0
        %894 = vmatpush1.msra.mxu0 0.0
        %895 = vmatprep.subr.mxu0 0.0
        %896 = vmatpush1.msra.mxu0 0.0
        %897 = vmatprep.subr.mxu0 0.0
        %898 = vmatpush1.msra.mxu0 0.0
        %899 = vmatprep.subr.mxu0 0.0
        %900 = vmatpush1.msra.mxu0 0.0
        %901 = vmatprep.mubr.f32.mxu0 0.0
        %v902 = vand.u32 %v496, 4294901760
        %903 = vmatmul.mubr.f32.gmra.mrb[0].mxu0 %v902
        %v904 = vpop.f32.mrb[0].mxu0
        %v905 = vadd.f32 %v822, %v904
        %v906 = vpop.f32.mrb[0].mxu0
        %907 = vdwg.mxu0
        %908 = vmatprep.subr.mxu0 0.0
        %v909 = vand.u32 %v483, 4294901760
        %910 = vmatpush1.msra.mxu0 %v909
        %911 = vmatprep.subr.mxu0 0.0
        %v912 = vand.u32 %v484, 4294901760
        %913 = vmatpush1.msra.mxu0 %v912
        %914 = vmatprep.subr.mxu0 0.0
        %v915 = vand.u32 %v485, 4294901760
        %916 = vmatpush1.msra.mxu0 %v915
        %917 = vmatprep.subr.mxu0 0.0
        %v918 = vand.u32 %v486, 4294901760
        %919 = vmatpush1.msra.mxu0 %v918
        %920 = vmatprep.subr.mxu0 0.0
        %921 = vmatpush1.msra.mxu0 0.0
        %922 = vmatprep.subr.mxu0 0.0
        %923 = vmatpush1.msra.mxu0 0.0
        %924 = vmatprep.subr.mxu0 0.0
        %925 = vmatpush1.msra.mxu0 0.0
        %926 = vmatprep.subr.mxu0 0.0
        %927 = vmatpush1.msra.mxu0 0.0
        %928 = vmatprep.subr.mxu0 0.0
        %929 = vmatpush1.msra.mxu0 0.0
        %930 = vmatprep.subr.mxu0 0.0
        %931 = vmatpush1.msra.mxu0 0.0
        %932 = vmatprep.subr.mxu0 0.0
        %933 = vmatpush1.msra.mxu0 0.0
        %934 = vmatprep.subr.mxu0 0.0
        %935 = vmatpush1.msra.mxu0 0.0
        %936 = vmatprep.subr.mxu0 0.0
        %937 = vmatpush1.msra.mxu0 0.0
        %938 = vmatprep.subr.mxu0 0.0
        %939 = vmatpush1.msra.mxu0 0.0
        %940 = vmatprep.subr.mxu0 0.0
        %941 = vmatpush1.msra.mxu0 0.0
        %942 = vmatprep.subr.mxu0 0.0
        %943 = vmatpush1.msra.mxu0 0.0
        %944 = vmatprep.subr.mxu0 0.0
        %945 = vmatpush1.msra.mxu0 0.0
        %946 = vmatprep.subr.mxu0 0.0
        %947 = vmatpush1.msra.mxu0 0.0
        %948 = vmatprep.subr.mxu0 0.0
        %949 = vmatpush1.msra.mxu0 0.0
        %950 = vmatprep.subr.mxu0 0.0
        %951 = vmatpush1.msra.mxu0 0.0
        %952 = vmatprep.subr.mxu0 0.0
        %953 = vmatpush1.msra.mxu0 0.0
        %954 = vmatprep.subr.mxu0 0.0
        %955 = vmatpush1.msra.mxu0 0.0
        %956 = vmatprep.subr.mxu0 0.0
        %957 = vmatpush1.msra.mxu0 0.0
        %958 = vmatprep.subr.mxu0 0.0
        %959 = vmatpush1.msra.mxu0 0.0
        %960 = vmatprep.subr.mxu0 0.0
        %961 = vmatpush1.msra.mxu0 0.0
        %962 = vmatprep.subr.mxu0 0.0
        %963 = vmatpush1.msra.mxu0 0.0
        %964 = vmatprep.subr.mxu0 0.0
        %965 = vmatpush1.msra.mxu0 0.0
        %966 = vmatprep.subr.mxu0 0.0
        %967 = vmatpush1.msra.mxu0 0.0
        %968 = vmatprep.subr.mxu0 0.0
        %969 = vmatpush1.msra.mxu0 0.0
        %970 = vmatprep.subr.mxu0 0.0
        %971 = vmatpush1.msra.mxu0 0.0
        %972 = vmatprep.subr.mxu0 0.0
        %973 = vmatpush1.msra.mxu0 0.0
        %974 = vmatprep.subr.mxu0 0.0
        %975 = vmatpush1.msra.mxu0 0.0
        %976 = vmatprep.mubr.f32.mxu0 0.0
        %v977 = vand.u32 %v496, 4294901760
        %978 = vmatmul.mubr.f32.gmra.mrb[0].mxu0 %v977
        %v979 = vpop.f32.mrb[0].mxu0
        %v980 = vadd.f32 %v905, %v979
        %v981 = vpop.f32.mrb[0].mxu0
        %982 = vdwg.mxu0
        %v983 = vld [vmem:[#allocation10] sm:$0xff]
        %v984 = vld [vmem:[#allocation10 + $0x8] sm:$0xff]
        %v985 = vld [vmem:[#allocation10 + $0x10] sm:$0xff]
        %v986 = vld [vmem:[#allocation10 + $0x18] sm:$0xff]
        %v988 = vsel %vm494, %v980, 0
        %990 = vmatprep.subr.mxu0 0.0
        %v991 = vand.u32 %v983, 4294901760
        %992 = vmatpush1.msra.mxu0 %v991
        %993 = vmatprep.subr.mxu0 0.0
        %v994 = vand.u32 %v984, 4294901760
        %995 = vmatpush1.msra.mxu0 %v994
        %996 = vmatprep.subr.mxu0 0.0
        %v997 = vand.u32 %v985, 4294901760
        %998 = vmatpush1.msra.mxu0 %v997
        %999 = vmatprep.subr.mxu0 0.0
        %v1000 = vand.u32 %v986, 4294901760
        %1001 = vmatpush1.msra.mxu0 %v1000
        %1002 = vmatprep.subr.mxu0 0.0
        %1003 = vmatpush1.msra.mxu0 0.0
        %1004 = vmatprep.subr.mxu0 0.0
        %1005 = vmatpush1.msra.mxu0 0.0
        %1006 = vmatprep.subr.mxu0 0.0
        %1007 = vmatpush1.msra.mxu0 0.0
        %1008 = vmatprep.subr.mxu0 0.0
        %1009 = vmatpush1.msra.mxu0 0.0
        %1010 = vmatprep.subr.mxu0 0.0
        %1011 = vmatpush1.msra.mxu0 0.0
        %1012 = vmatprep.subr.mxu0 0.0
        %1013 = vmatpush1.msra.mxu0 0.0
        %1014 = vmatprep.subr.mxu0 0.0
        %1015 = vmatpush1.msra.mxu0 0.0
        %1016 = vmatprep.subr.mxu0 0.0
        %1017 = vmatpush1.msra.mxu0 0.0
        %1018 = vmatprep.subr.mxu0 0.0
        %1019 = vmatpush1.msra.mxu0 0.0
        %1020 = vmatprep.subr.mxu0 0.0
        %1021 = vmatpush1.msra.mxu0 0.0
        %1022 = vmatprep.subr.mxu0 0.0
        %1023 = vmatpush1.msra.mxu0 0.0
        %1024 = vmatprep.subr.mxu0 0.0
        %1025 = vmatpush1.msra.mxu0 0.0
        %1026 = vmatprep.subr.mxu0 0.0
        %1027 = vmatpush1.msra.mxu0 0.0
        %1028 = vmatprep.subr.mxu0 0.0
        %1029 = vmatpush1.msra.mxu0 0.0
        %1030 = vmatprep.subr.mxu0 0.0
        %1031 = vmatpush1.msra.mxu0 0.0
        %1032 = vmatprep.subr.mxu0 0.0
        %1033 = vmatpush1.msra.mxu0 0.0
        %1034 = vmatprep.subr.mxu0 0.0
        %1035 = vmatpush1.msra.mxu0 0.0
        %1036 = vmatprep.subr.mxu0 0.0
        %1037 = vmatpush1.msra.mxu0 0.0
        %1038 = vmatprep.subr.mxu0 0.0
        %1039 = vmatpush1.msra.mxu0 0.0
        %1040 = vmatprep.subr.mxu0 0.0
        %1041 = vmatpush1.msra.mxu0 0.0
        %1042 = vmatprep.subr.mxu0 0.0
        %1043 = vmatpush1.msra.mxu0 0.0
        %1044 = vmatprep.subr.mxu0 0.0
        %1045 = vmatpush1.msra.mxu0 0.0
        %1046 = vmatprep.subr.mxu0 0.0
        %1047 = vmatpush1.msra.mxu0 0.0
        %1048 = vmatprep.subr.mxu0 0.0
        %1049 = vmatpush1.msra.mxu0 0.0
        %1050 = vmatprep.subr.mxu0 0.0
        %1051 = vmatpush1.msra.mxu0 0.0
        %1052 = vmatprep.subr.mxu0 0.0
        %1053 = vmatpush1.msra.mxu0 0.0
        %1054 = vmatprep.subr.mxu0 0.0
        %1055 = vmatpush1.msra.mxu0 0.0
        %1056 = vmatprep.subr.mxu0 0.0
        %1057 = vmatpush1.msra.mxu0 0.0
        %1058 = vmatprep.mubr.f32.mxu0 0.0
        %v1059 = vand.u32 %v988, 4294901760
        %v1060 = vsub.f32 %v988, %v1059
        %v1061 = vand.u32 %v1060, 4294901760
        %v1062 = vsub.f32 %v1060, %v1061
        %v1063 = vand.u32 %v1062, 4294901760
        %1064 = vmatmul.mubr.f32.gmra.mrb[0].mxu0 %v1063
        %v1065 = vpop.f32.mrb[0].mxu0
        %v1066 = vadd.f32 0.0, %v1065
        %v1067 = vpop.f32.mrb[0].mxu0
        %1068 = vdwg.mxu0
        %1069 = vmatprep.subr.mxu0 0.0
        %v1070 = vand.u32 %v983, 4294901760
        %v1071 = vsub.f32 %v983, %v1070
        %v1072 = vand.u32 %v1071, 4294901760
        %v1073 = vsub.f32 %v1071, %v1072
        %v1074 = vand.u32 %v1073, 4294901760
        %1075 = vmatpush1.msra.mxu0 %v1074
        %1076 = vmatprep.subr.mxu0 0.0
        %v1077 = vand.u32 %v984, 4294901760
        %v1078 = vsub.f32 %v984, %v1077
        %v1079 = vand.u32 %v1078, 4294901760
        %v1080 = vsub.f32 %v1078, %v1079
        %v1081 = vand.u32 %v1080, 4294901760
        %1082 = vmatpush1.msra.mxu0 %v1081
        %1083 = vmatprep.subr.mxu0 0.0
        %v1084 = vand.u32 %v985, 4294901760
        %v1085 = vsub.f32 %v985, %v1084
        %v1086 = vand.u32 %v1085, 4294901760
        %v1087 = vsub.f32 %v1085, %v1086
        %v1088 = vand.u32 %v1087, 4294901760
        %1089 = vmatpush1.msra.mxu0 %v1088
        %1090 = vmatprep.subr.mxu0 0.0
        %v1091 = vand.u32 %v986, 4294901760
        %v1092 = vsub.f32 %v986, %v1091
        %v1093 = vand.u32 %v1092, 4294901760
        %v1094 = vsub.f32 %v1092, %v1093
        %v1095 = vand.u32 %v1094, 4294901760
        %1096 = vmatpush1.msra.mxu0 %v1095
        %1097 = vmatprep.subr.mxu0 0.0
        %1098 = vmatpush1.msra.mxu0 0.0
        %1099 = vmatprep.subr.mxu0 0.0
        %1100 = vmatpush1.msra.mxu0 0.0
        %1101 = vmatprep.subr.mxu0 0.0
        %1102 = vmatpush1.msra.mxu0 0.0
        %1103 = vmatprep.subr.mxu0 0.0
        %1104 = vmatpush1.msra.mxu0 0.0
        %1105 = vmatprep.subr.mxu0 0.0
        %1106 = vmatpush1.msra.mxu0 0.0
        %1107 = vmatprep.subr.mxu0 0.0
        %1108 = vmatpush1.msra.mxu0 0.0
        %1109 = vmatprep.subr.mxu0 0.0
        %1110 = vmatpush1.msra.mxu0 0.0
        %1111 = vmatprep.subr.mxu0 0.0
        %1112 = vmatpush1.msra.mxu0 0.0
        %1113 = vmatprep.subr.mxu0 0.0
        %1114 = vmatpush1.msra.mxu0 0.0
        %1115 = vmatprep.subr.mxu0 0.0
        %1116 = vmatpush1.msra.mxu0 0.0
        %1117 = vmatprep.subr.mxu0 0.0
        %1118 = vmatpush1.msra.mxu0 0.0
        %1119 = vmatprep.subr.mxu0 0.0
        %1120 = vmatpush1.msra.mxu0 0.0
        %1121 = vmatprep.subr.mxu0 0.0
        %1122 = vmatpush1.msra.mxu0 0.0
        %1123 = vmatprep.subr.mxu0 0.0
        %1124 = vmatpush1.msra.mxu0 0.0
        %1125 = vmatprep.subr.mxu0 0.0
        %1126 = vmatpush1.msra.mxu0 0.0
        %1127 = vmatprep.subr.mxu0 0.0
        %1128 = vmatpush1.msra.mxu0 0.0
        %1129 = vmatprep.subr.mxu0 0.0
        %1130 = vmatpush1.msra.mxu0 0.0
        %1131 = vmatprep.subr.mxu0 0.0
        %1132 = vmatpush1.msra.mxu0 0.0
        %1133 = vmatprep.subr.mxu0 0.0
        %1134 = vmatpush1.msra.mxu0 0.0
        %1135 = vmatprep.subr.mxu0 0.0
        %1136 = vmatpush1.msra.mxu0 0.0
        %1137 = vmatprep.subr.mxu0 0.0
        %1138 = vmatpush1.msra.mxu0 0.0
        %1139 = vmatprep.subr.mxu0 0.0
        %1140 = vmatpush1.msra.mxu0 0.0
        %1141 = vmatprep.subr.mxu0 0.0
        %1142 = vmatpush1.msra.mxu0 0.0
        %1143 = vmatprep.subr.mxu0 0.0
        %1144 = vmatpush1.msra.mxu0 0.0
        %1145 = vmatprep.subr.mxu0 0.0
        %1146 = vmatpush1.msra.mxu0 0.0
        %1147 = vmatprep.subr.mxu0 0.0
        %1148 = vmatpush1.msra.mxu0 0.0
        %1149 = vmatprep.subr.mxu0 0.0
        %1150 = vmatpush1.msra.mxu0 0.0
        %1151 = vmatprep.subr.mxu0 0.0
        %1152 = vmatpush1.msra.mxu0 0.0
        %1153 = vmatprep.mubr.f32.mxu0 0.0
        %v1154 = vand.u32 %v988, 4294901760
        %1155 = vmatmul.mubr.f32.gmra.mrb[0].mxu0 %v1154
        %v1156 = vpop.f32.mrb[0].mxu0
        %v1157 = vadd.f32 %v1066, %v1156
        %v1158 = vpop.f32.mrb[0].mxu0
        %1159 = vdwg.mxu0
        %1160 = vmatprep.subr.mxu0 0.0
        %v1161 = vand.u32 %v983, 4294901760
        %v1162 = vsub.f32 %v983, %v1161
        %1163 = vmatpush1.msra.mxu0 %v1162
        %1164 = vmatprep.subr.mxu0 0.0
        %v1165 = vand.u32 %v984, 4294901760
        %v1166 = vsub.f32 %v984, %v1165
        %1167 = vmatpush1.msra.mxu0 %v1166
        %1168 = vmatprep.subr.mxu0 0.0
        %v1169 = vand.u32 %v985, 4294901760
        %v1170 = vsub.f32 %v985, %v1169
        %1171 = vmatpush1.msra.mxu0 %v1170
        %1172 = vmatprep.subr.mxu0 0.0
        %v1173 = vand.u32 %v986, 4294901760
        %v1174 = vsub.f32 %v986, %v1173
        %1175 = vmatpush1.msra.mxu0 %v1174
        %1176 = vmatprep.subr.mxu0 0.0
        %1177 = vmatpush1.msra.mxu0 0.0
        %1178 = vmatprep.subr.mxu0 0.0
        %1179 = vmatpush1.msra.mxu0 0.0
        %1180 = vmatprep.subr.mxu0 0.0
        %1181 = vmatpush1.msra.mxu0 0.0
        %1182 = vmatprep.subr.mxu0 0.0
        %1183 = vmatpush1.msra.mxu0 0.0
        %1184 = vmatprep.subr.mxu0 0.0
        %1185 = vmatpush1.msra.mxu0 0.0
        %1186 = vmatprep.subr.mxu0 0.0
        %1187 = vmatpush1.msra.mxu0 0.0
        %1188 = vmatprep.subr.mxu0 0.0
        %1189 = vmatpush1.msra.mxu0 0.0
        %1190 = vmatprep.subr.mxu0 0.0
        %1191 = vmatpush1.msra.mxu0 0.0
        %1192 = vmatprep.subr.mxu0 0.0
        %1193 = vmatpush1.msra.mxu0 0.0
        %1194 = vmatprep.subr.mxu0 0.0
        %1195 = vmatpush1.msra.mxu0 0.0
        %1196 = vmatprep.subr.mxu0 0.0
        %1197 = vmatpush1.msra.mxu0 0.0
        %1198 = vmatprep.subr.mxu0 0.0
        %1199 = vmatpush1.msra.mxu0 0.0
        %1200 = vmatprep.subr.mxu0 0.0
        %1201 = vmatpush1.msra.mxu0 0.0
        %1202 = vmatprep.subr.mxu0 0.0
        %1203 = vmatpush1.msra.mxu0 0.0
        %1204 = vmatprep.subr.mxu0 0.0
        %1205 = vmatpush1.msra.mxu0 0.0
        %1206 = vmatprep.subr.mxu0 0.0
        %1207 = vmatpush1.msra.mxu0 0.0
        %1208 = vmatprep.subr.mxu0 0.0
        %1209 = vmatpush1.msra.mxu0 0.0
        %1210 = vmatprep.subr.mxu0 0.0
        %1211 = vmatpush1.msra.mxu0 0.0
        %1212 = vmatprep.subr.mxu0 0.0
        %1213 = vmatpush1.msra.mxu0 0.0
        %1214 = vmatprep.subr.mxu0 0.0
        %1215 = vmatpush1.msra.mxu0 0.0
        %1216 = vmatprep.subr.mxu0 0.0
        %1217 = vmatpush1.msra.mxu0 0.0
        %1218 = vmatprep.subr.mxu0 0.0
        %1219 = vmatpush1.msra.mxu0 0.0
        %1220 = vmatprep.subr.mxu0 0.0
        %1221 = vmatpush1.msra.mxu0 0.0
        %1222 = vmatprep.subr.mxu0 0.0
        %1223 = vmatpush1.msra.mxu0 0.0
        %1224 = vmatprep.subr.mxu0 0.0
        %1225 = vmatpush1.msra.mxu0 0.0
        %1226 = vmatprep.subr.mxu0 0.0
        %1227 = vmatpush1.msra.mxu0 0.0
        %1228 = vmatprep.subr.mxu0 0.0
        %1229 = vmatpush1.msra.mxu0 0.0
        %1230 = vmatprep.subr.mxu0 0.0
        %1231 = vmatpush1.msra.mxu0 0.0
        %1232 = vmatprep.mubr.f32.mxu0 0.0
        %v1233 = vand.u32 %v988, 4294901760
        %v1234 = vsub.f32 %v988, %v1233
        %1235 = vmatmul.mubr.f32.gmra.mrb[0].mxu0 %v1234
        %v1236 = vpop.f32.mrb[0].mxu0
        %v1237 = vadd.f32 %v1157, %v1236
        %v1238 = vpop.f32.mrb[0].mxu0
        %1239 = vdwg.mxu0
        %1240 = vmatprep.subr.mxu0 0.0
        %v1241 = vand.u32 %v983, 4294901760
        %1242 = vmatpush1.msra.mxu0 %v1241
        %1243 = vmatprep.subr.mxu0 0.0
        %v1244 = vand.u32 %v984, 4294901760
        %1245 = vmatpush1.msra.mxu0 %v1244
        %1246 = vmatprep.subr.mxu0 0.0
        %v1247 = vand.u32 %v985, 4294901760
        %1248 = vmatpush1.msra.mxu0 %v1247
        %1249 = vmatprep.subr.mxu0 0.0
        %v1250 = vand.u32 %v986, 4294901760
        %1251 = vmatpush1.msra.mxu0 %v1250
        %1252 = vmatprep.subr.mxu0 0.0
        %1253 = vmatpush1.msra.mxu0 0.0
        %1254 = vmatprep.subr.mxu0 0.0
        %1255 = vmatpush1.msra.mxu0 0.0
        %1256 = vmatprep.subr.mxu0 0.0
        %1257 = vmatpush1.msra.mxu0 0.0
        %1258 = vmatprep.subr.mxu0 0.0
        %1259 = vmatpush1.msra.mxu0 0.0
        %1260 = vmatprep.subr.mxu0 0.0
        %1261 = vmatpush1.msra.mxu0 0.0
        %1262 = vmatprep.subr.mxu0 0.0
        %1263 = vmatpush1.msra.mxu0 0.0
        %1264 = vmatprep.subr.mxu0 0.0
        %1265 = vmatpush1.msra.mxu0 0.0
        %1266 = vmatprep.subr.mxu0 0.0
        %1267 = vmatpush1.msra.mxu0 0.0
        %1268 = vmatprep.subr.mxu0 0.0
        %1269 = vmatpush1.msra.mxu0 0.0
        %1270 = vmatprep.subr.mxu0 0.0
        %1271 = vmatpush1.msra.mxu0 0.0
        %1272 = vmatprep.subr.mxu0 0.0
        %1273 = vmatpush1.msra.mxu0 0.0
        %1274 = vmatprep.subr.mxu0 0.0
        %1275 = vmatpush1.msra.mxu0 0.0
        %1276 = vmatprep.subr.mxu0 0.0
        %1277 = vmatpush1.msra.mxu0 0.0
        %1278 = vmatprep.subr.mxu0 0.0
        %1279 = vmatpush1.msra.mxu0 0.0
        %1280 = vmatprep.subr.mxu0 0.0
        %1281 = vmatpush1.msra.mxu0 0.0
        %1282 = vmatprep.subr.mxu0 0.0
        %1283 = vmatpush1.msra.mxu0 0.0
        %1284 = vmatprep.subr.mxu0 0.0
        %1285 = vmatpush1.msra.mxu0 0.0
        %1286 = vmatprep.subr.mxu0 0.0
        %1287 = vmatpush1.msra.mxu0 0.0
        %1288 = vmatprep.subr.mxu0 0.0
        %1289 = vmatpush1.msra.mxu0 0.0
        %1290 = vmatprep.subr.mxu0 0.0
        %1291 = vmatpush1.msra.mxu0 0.0
        %1292 = vmatprep.subr.mxu0 0.0
        %1293 = vmatpush1.msra.mxu0 0.0
        %1294 = vmatprep.subr.mxu0 0.0
        %1295 = vmatpush1.msra.mxu0 0.0
        %1296 = vmatprep.subr.mxu0 0.0
        %1297 = vmatpush1.msra.mxu0 0.0
        %1298 = vmatprep.subr.mxu0 0.0
        %1299 = vmatpush1.msra.mxu0 0.0
        %1300 = vmatprep.subr.mxu0 0.0
        %1301 = vmatpush1.msra.mxu0 0.0
        %1302 = vmatprep.subr.mxu0 0.0
        %1303 = vmatpush1.msra.mxu0 0.0
        %1304 = vmatprep.subr.mxu0 0.0
        %1305 = vmatpush1.msra.mxu0 0.0
        %1306 = vmatprep.subr.mxu0 0.0
        %1307 = vmatpush1.msra.mxu0 0.0
        %1308 = vmatprep.mubr.f32.mxu0 0.0
        %v1309 = vand.u32 %v988, 4294901760
        %v1310 = vsub.f32 %v988, %v1309
        %v1311 = vand.u32 %v1310, 4294901760
        %1312 = vmatmul.mubr.f32.gmra.mrb[0].mxu0 %v1311
        %v1313 = vpop.f32.mrb[0].mxu0
        %v1314 = vadd.f32 %v1237, %v1313
        %v1315 = vpop.f32.mrb[0].mxu0
        %1316 = vdwg.mxu0
        %1317 = vmatprep.subr.mxu0 0.0
        %v1318 = vand.u32 %v983, 4294901760
        %v1319 = vsub.f32 %v983, %v1318
        %v1320 = vand.u32 %v1319, 4294901760
        %1321 = vmatpush1.msra.mxu0 %v1320
        %1322 = vmatprep.subr.mxu0 0.0
        %v1323 = vand.u32 %v984, 4294901760
        %v1324 = vsub.f32 %v984, %v1323
        %v1325 = vand.u32 %v1324, 4294901760
        %1326 = vmatpush1.msra.mxu0 %v1325
        %1327 = vmatprep.subr.mxu0 0.0
        %v1328 = vand.u32 %v985, 4294901760
        %v1329 = vsub.f32 %v985, %v1328
        %v1330 = vand.u32 %v1329, 4294901760
        %1331 = vmatpush1.msra.mxu0 %v1330
        %1332 = vmatprep.subr.mxu0 0.0
        %v1333 = vand.u32 %v986, 4294901760
        %v1334 = vsub.f32 %v986, %v1333
        %v1335 = vand.u32 %v1334, 4294901760
        %1336 = vmatpush1.msra.mxu0 %v1335
        %1337 = vmatprep.subr.mxu0 0.0
        %1338 = vmatpush1.msra.mxu0 0.0
        %1339 = vmatprep.subr.mxu0 0.0
        %1340 = vmatpush1.msra.mxu0 0.0
        %1341 = vmatprep.subr.mxu0 0.0
        %1342 = vmatpush1.msra.mxu0 0.0
        %1343 = vmatprep.subr.mxu0 0.0
        %1344 = vmatpush1.msra.mxu0 0.0
        %1345 = vmatprep.subr.mxu0 0.0
        %1346 = vmatpush1.msra.mxu0 0.0
        %1347 = vmatprep.subr.mxu0 0.0
        %1348 = vmatpush1.msra.mxu0 0.0
        %1349 = vmatprep.subr.mxu0 0.0
        %1350 = vmatpush1.msra.mxu0 0.0
        %1351 = vmatprep.subr.mxu0 0.0
        %1352 = vmatpush1.msra.mxu0 0.0
        %1353 = vmatprep.subr.mxu0 0.0
        %1354 = vmatpush1.msra.mxu0 0.0
        %1355 = vmatprep.subr.mxu0 0.0
        %1356 = vmatpush1.msra.mxu0 0.0
        %1357 = vmatprep.subr.mxu0 0.0
        %1358 = vmatpush1.msra.mxu0 0.0
        %1359 = vmatprep.subr.mxu0 0.0
        %1360 = vmatpush1.msra.mxu0 0.0
        %1361 = vmatprep.subr.mxu0 0.0
        %1362 = vmatpush1.msra.mxu0 0.0
        %1363 = vmatprep.subr.mxu0 0.0
        %1364 = vmatpush1.msra.mxu0 0.0
        %1365 = vmatprep.subr.mxu0 0.0
        %1366 = vmatpush1.msra.mxu0 0.0
        %1367 = vmatprep.subr.mxu0 0.0
        %1368 = vmatpush1.msra.mxu0 0.0
        %1369 = vmatprep.subr.mxu0 0.0
        %1370 = vmatpush1.msra.mxu0 0.0
        %1371 = vmatprep.subr.mxu0 0.0
        %1372 = vmatpush1.msra.mxu0 0.0
        %1373 = vmatprep.subr.mxu0 0.0
        %1374 = vmatpush1.msra.mxu0 0.0
        %1375 = vmatprep.subr.mxu0 0.0
        %1376 = vmatpush1.msra.mxu0 0.0
        %1377 = vmatprep.subr.mxu0 0.0
        %1378 = vmatpush1.msra.mxu0 0.0
        %1379 = vmatprep.subr.mxu0 0.0
        %1380 = vmatpush1.msra.mxu0 0.0
        %1381 = vmatprep.subr.mxu0 0.0
        %1382 = vmatpush1.msra.mxu0 0.0
        %1383 = vmatprep.subr.mxu0 0.0
        %1384 = vmatpush1.msra.mxu0 0.0
        %1385 = vmatprep.subr.mxu0 0.0
        %1386 = vmatpush1.msra.mxu0 0.0
        %1387 = vmatprep.subr.mxu0 0.0
        %1388 = vmatpush1.msra.mxu0 0.0
        %1389 = vmatprep.subr.mxu0 0.0
        %1390 = vmatpush1.msra.mxu0 0.0
        %1391 = vmatprep.subr.mxu0 0.0
        %1392 = vmatpush1.msra.mxu0 0.0
        %1393 = vmatprep.mubr.f32.mxu0 0.0
        %v1394 = vand.u32 %v988, 4294901760
        %1395 = vmatmul.mubr.f32.gmra.mrb[0].mxu0 %v1394
        %v1396 = vpop.f32.mrb[0].mxu0
        %v1397 = vadd.f32 %v1314, %v1396
        %v1398 = vpop.f32.mrb[0].mxu0
        %1399 = vdwg.mxu0
        %1400 = vmatprep.subr.mxu0 0.0
        %v1401 = vand.u32 %v983, 4294901760
        %1402 = vmatpush1.msra.mxu0 %v1401
        %1403 = vmatprep.subr.mxu0 0.0
        %v1404 = vand.u32 %v984, 4294901760
        %1405 = vmatpush1.msra.mxu0 %v1404
        %1406 = vmatprep.subr.mxu0 0.0
        %v1407 = vand.u32 %v985, 4294901760
        %1408 = vmatpush1.msra.mxu0 %v1407
        %1409 = vmatprep.subr.mxu0 0.0
        %v1410 = vand.u32 %v986, 4294901760
        %1411 = vmatpush1.msra.mxu0 %v1410
        %1412 = vmatprep.subr.mxu0 0.0
        %1413 = vmatpush1.msra.mxu0 0.0
        %1414 = vmatprep.subr.mxu0 0.0
        %1415 = vmatpush1.msra.mxu0 0.0
        %1416 = vmatprep.subr.mxu0 0.0
        %1417 = vmatpush1.msra.mxu0 0.0
        %1418 = vmatprep.subr.mxu0 0.0
        %1419 = vmatpush1.msra.mxu0 0.0
        %1420 = vmatprep.subr.mxu0 0.0
        %1421 = vmatpush1.msra.mxu0 0.0
        %1422 = vmatprep.subr.mxu0 0.0
        %1423 = vmatpush1.msra.mxu0 0.0
        %1424 = vmatprep.subr.mxu0 0.0
        %1425 = vmatpush1.msra.mxu0 0.0
        %1426 = vmatprep.subr.mxu0 0.0
        %1427 = vmatpush1.msra.mxu0 0.0
        %1428 = vmatprep.subr.mxu0 0.0
        %1429 = vmatpush1.msra.mxu0 0.0
        %1430 = vmatprep.subr.mxu0 0.0
        %1431 = vmatpush1.msra.mxu0 0.0
        %1432 = vmatprep.subr.mxu0 0.0
        %1433 = vmatpush1.msra.mxu0 0.0
        %1434 = vmatprep.subr.mxu0 0.0
        %1435 = vmatpush1.msra.mxu0 0.0
        %1436 = vmatprep.subr.mxu0 0.0
        %1437 = vmatpush1.msra.mxu0 0.0
        %1438 = vmatprep.subr.mxu0 0.0
        %1439 = vmatpush1.msra.mxu0 0.0
        %1440 = vmatprep.subr.mxu0 0.0
        %1441 = vmatpush1.msra.mxu0 0.0
        %1442 = vmatprep.subr.mxu0 0.0
        %1443 = vmatpush1.msra.mxu0 0.0
        %1444 = vmatprep.subr.mxu0 0.0
        %1445 = vmatpush1.msra.mxu0 0.0
        %1446 = vmatprep.subr.mxu0 0.0
        %1447 = vmatpush1.msra.mxu0 0.0
        %1448 = vmatprep.subr.mxu0 0.0
        %1449 = vmatpush1.msra.mxu0 0.0
        %1450 = vmatprep.subr.mxu0 0.0
        %1451 = vmatpush1.msra.mxu0 0.0
        %1452 = vmatprep.subr.mxu0 0.0
        %1453 = vmatpush1.msra.mxu0 0.0
        %1454 = vmatprep.subr.mxu0 0.0
        %1455 = vmatpush1.msra.mxu0 0.0
        %1456 = vmatprep.subr.mxu0 0.0
        %1457 = vmatpush1.msra.mxu0 0.0
        %1458 = vmatprep.subr.mxu0 0.0
        %1459 = vmatpush1.msra.mxu0 0.0
        %1460 = vmatprep.subr.mxu0 0.0
        %1461 = vmatpush1.msra.mxu0 0.0
        %1462 = vmatprep.subr.mxu0 0.0
        %1463 = vmatpush1.msra.mxu0 0.0
        %1464 = vmatprep.subr.mxu0 0.0
        %1465 = vmatpush1.msra.mxu0 0.0
        %1466 = vmatprep.subr.mxu0 0.0
        %1467 = vmatpush1.msra.mxu0 0.0
        %1468 = vmatprep.mubr.f32.mxu0 0.0
        %v1469 = vand.u32 %v988, 4294901760
        %1470 = vmatmul.mubr.f32.gmra.mrb[0].mxu0 %v1469
        %v1471 = vpop.f32.mrb[0].mxu0
        %v1472 = vadd.f32 %v1397, %v1471
        %v1473 = vpop.f32.mrb[0].mxu0
        %1474 = vdwg.mxu0
        %v1475 = vld [vmem:[#allocation7] sm:$0xff]
        %v1476 = vmul.f32 %v980, %v1475
        %v1477 = vld [vmem:[#allocation8] sm:$0xff]
        %v1478 = vmul.f32 %v1472, %v1477
        %v1479 = vadd.f32 %v1476, %v1478
        %v1480 = vmul.f32 %v1479, 0.25
        %1482 = vrot.lane.b32.xlu0 %v1479, 112
        %v1483 = vpop.permute.xlu0 %1482
        %vm1484 = vcmask 130048
        %v1486 = vsel %vm1484, %v1480, 0
        %v1488 = vsel %vm1484, %v1483, 0
        %1490 = vmatprep.subr.mxu0 0.0
        %v1491 = vand.u32 %v1488, 4294901760
        %1492 = vmatpush1.xpose.msra.mxu0 %v1491
        %1493 = vmatprep.subr.mxu0 0.0
        %1494 = vmatpush1.xpose.msra.mxu0 0.0
        %1495 = vmatprep.subr.mxu0 0.0
        %1496 = vmatpush1.xpose.msra.mxu0 0.0
        %1497 = vmatprep.subr.mxu0 0.0
        %1498 = vmatpush1.xpose.msra.mxu0 0.0
        %1499 = vmatprep.subr.mxu0 0.0
        %1500 = vmatpush1.xpose.msra.mxu0 0.0
        %1501 = vmatprep.subr.mxu0 0.0
        %1502 = vmatpush1.xpose.msra.mxu0 0.0
        %1503 = vmatprep.subr.mxu0 0.0
        %1504 = vmatpush1.xpose.msra.mxu0 0.0
        %1505 = vmatprep.subr.mxu0 0.0
        %1506 = vmatpush1.xpose.msra.mxu0 0.0
        %1507 = vmatprep.subr.mxu0 0.0
        %1508 = vmatpush1.xpose.msra.mxu0 0.0
        %1509 = vmatprep.subr.mxu0 0.0
        %1510 = vmatpush1.xpose.msra.mxu0 0.0
        %1511 = vmatprep.subr.mxu0 0.0
        %1512 = vmatpush1.xpose.msra.mxu0 0.0
        %1513 = vmatprep.subr.mxu0 0.0
        %1514 = vmatpush1.xpose.msra.mxu0 0.0
        %1515 = vmatprep.subr.mxu0 0.0
        %1516 = vmatpush1.xpose.msra.mxu0 0.0
        %1517 = vmatprep.subr.mxu0 0.0
        %1518 = vmatpush1.xpose.msra.mxu0 0.0
        %1519 = vmatprep.subr.mxu0 0.0
        %1520 = vmatpush1.xpose.msra.mxu0 0.0
        %1521 = vmatprep.subr.mxu0 0.0
        %1522 = vmatpush1.xpose.msra.mxu0 0.0
        %1523 = vmatprep.subr.mxu0 0.0
        %1524 = vmatpush1.xpose.msra.mxu0 0.0
        %1525 = vmatprep.subr.mxu0 0.0
        %1526 = vmatpush1.xpose.msra.mxu0 0.0
        %1527 = vmatprep.subr.mxu0 0.0
        %1528 = vmatpush1.xpose.msra.mxu0 0.0
        %1529 = vmatprep.subr.mxu0 0.0
        %1530 = vmatpush1.xpose.msra.mxu0 0.0
        %1531 = vmatprep.subr.mxu0 0.0
        %1532 = vmatpush1.xpose.msra.mxu0 0.0
        %1533 = vmatprep.subr.mxu0 0.0
        %1534 = vmatpush1.xpose.msra.mxu0 0.0
        %1535 = vmatprep.subr.mxu0 0.0
        %1536 = vmatpush1.xpose.msra.mxu0 0.0
        %1537 = vmatprep.subr.mxu0 0.0
        %1538 = vmatpush1.xpose.msra.mxu0 0.0
        %1539 = vmatprep.subr.mxu0 0.0
        %1540 = vmatpush1.xpose.msra.mxu0 0.0
        %1541 = vmatprep.subr.mxu0 0.0
        %1542 = vmatpush1.xpose.msra.mxu0 0.0
        %1543 = vmatprep.subr.mxu0 0.0
        %1544 = vmatpush1.xpose.msra.mxu0 0.0
        %1545 = vmatprep.subr.mxu0 0.0
        %1546 = vmatpush1.xpose.msra.mxu0 0.0
        %1547 = vmatprep.subr.mxu0 0.0
        %1548 = vmatpush1.xpose.msra.mxu0 0.0
        %1549 = vmatprep.subr.mxu0 0.0
        %1550 = vmatpush1.xpose.msra.mxu0 0.0
        %1551 = vmatprep.subr.mxu0 0.0
        %1552 = vmatpush1.xpose.msra.mxu0 0.0
        %1553 = vmatprep.subr.mxu0 0.0
        %1554 = vmatpush1.xpose.msra.mxu0 0.0
        %1555 = vmatprep.mubr.f32.mxu0 0.0
        %v1556 = vand.u32 %v1486, 4294901760
        %v1557 = vsub.f32 %v1486, %v1556
        %v1558 = vand.u32 %v1557, 4294901760
        %v1559 = vsub.f32 %v1557, %v1558
        %v1560 = vand.u32 %v1559, 4294901760
        %1561 = vmatmul.mubr.f32.gmra.mrb[0].mxu0 %v1560
        %v1562 = vpop.f32.mrb[0].mxu0
        %v1563 = vadd.f32 0.0, %v1562
        %v1564 = vpop.f32.mrb[0].mxu0
        %1565 = vdwg.mxu0
        %1566 = vmatprep.subr.mxu0 0.0
        %v1567 = vand.u32 %v1488, 4294901760
        %v1568 = vsub.f32 %v1488, %v1567
        %v1569 = vand.u32 %v1568, 4294901760
        %v1570 = vsub.f32 %v1568, %v1569
        %v1571 = vand.u32 %v1570, 4294901760
        %1572 = vmatpush1.xpose.msra.mxu0 %v1571
        %1573 = vmatprep.subr.mxu0 0.0
        %1574 = vmatpush1.xpose.msra.mxu0 0.0
        %1575 = vmatprep.subr.mxu0 0.0
        %1576 = vmatpush1.xpose.msra.mxu0 0.0
        %1577 = vmatprep.subr.mxu0 0.0
        %1578 = vmatpush1.xpose.msra.mxu0 0.0
        %1579 = vmatprep.subr.mxu0 0.0
        %1580 = vmatpush1.xpose.msra.mxu0 0.0
        %1581 = vmatprep.subr.mxu0 0.0
        %1582 = vmatpush1.xpose.msra.mxu0 0.0
        %1583 = vmatprep.subr.mxu0 0.0
        %1584 = vmatpush1.xpose.msra.mxu0 0.0
        %1585 = vmatprep.subr.mxu0 0.0
        %1586 = vmatpush1.xpose.msra.mxu0 0.0
        %1587 = vmatprep.subr.mxu0 0.0
        %1588 = vmatpush1.xpose.msra.mxu0 0.0
        %1589 = vmatprep.subr.mxu0 0.0
        %1590 = vmatpush1.xpose.msra.mxu0 0.0
        %1591 = vmatprep.subr.mxu0 0.0
        %1592 = vmatpush1.xpose.msra.mxu0 0.0
        %1593 = vmatprep.subr.mxu0 0.0
        %1594 = vmatpush1.xpose.msra.mxu0 0.0
        %1595 = vmatprep.subr.mxu0 0.0
        %1596 = vmatpush1.xpose.msra.mxu0 0.0
        %1597 = vmatprep.subr.mxu0 0.0
        %1598 = vmatpush1.xpose.msra.mxu0 0.0
        %1599 = vmatprep.subr.mxu0 0.0
        %1600 = vmatpush1.xpose.msra.mxu0 0.0
        %1601 = vmatprep.subr.mxu0 0.0
        %1602 = vmatpush1.xpose.msra.mxu0 0.0
        %1603 = vmatprep.subr.mxu0 0.0
        %1604 = vmatpush1.xpose.msra.mxu0 0.0
        %1605 = vmatprep.subr.mxu0 0.0
        %1606 = vmatpush1.xpose.msra.mxu0 0.0
        %1607 = vmatprep.subr.mxu0 0.0
        %1608 = vmatpush1.xpose.msra.mxu0 0.0
        %1609 = vmatprep.subr.mxu0 0.0
        %1610 = vmatpush1.xpose.msra.mxu0 0.0
        %1611 = vmatprep.subr.mxu0 0.0
        %1612 = vmatpush1.xpose.msra.mxu0 0.0
        %1613 = vmatprep.subr.mxu0 0.0
        %1614 = vmatpush1.xpose.msra.mxu0 0.0
        %1615 = vmatprep.subr.mxu0 0.0
        %1616 = vmatpush1.xpose.msra.mxu0 0.0
        %1617 = vmatprep.subr.mxu0 0.0
        %1618 = vmatpush1.xpose.msra.mxu0 0.0
        %1619 = vmatprep.subr.mxu0 0.0
        %1620 = vmatpush1.xpose.msra.mxu0 0.0
        %1621 = vmatprep.subr.mxu0 0.0
        %1622 = vmatpush1.xpose.msra.mxu0 0.0
        %1623 = vmatprep.subr.mxu0 0.0
        %1624 = vmatpush1.xpose.msra.mxu0 0.0
        %1625 = vmatprep.subr.mxu0 0.0
        %1626 = vmatpush1.xpose.msra.mxu0 0.0
        %1627 = vmatprep.subr.mxu0 0.0
        %1628 = vmatpush1.xpose.msra.mxu0 0.0
        %1629 = vmatprep.subr.mxu0 0.0
        %1630 = vmatpush1.xpose.msra.mxu0 0.0
        %1631 = vmatprep.subr.mxu0 0.0
        %1632 = vmatpush1.xpose.msra.mxu0 0.0
        %1633 = vmatprep.subr.mxu0 0.0
        %1634 = vmatpush1.xpose.msra.mxu0 0.0
        %1635 = vmatprep.mubr.f32.mxu0 0.0
        %v1636 = vand.u32 %v1486, 4294901760
        %1637 = vmatmul.mubr.f32.gmra.mrb[0].mxu0 %v1636
        %v1638 = vpop.f32.mrb[0].mxu0
        %v1639 = vadd.f32 %v1563, %v1638
        %v1640 = vpop.f32.mrb[0].mxu0
        %1641 = vdwg.mxu0
        %1642 = vmatprep.subr.mxu0 0.0
        %v1643 = vand.u32 %v1488, 4294901760
        %v1644 = vsub.f32 %v1488, %v1643
        %1645 = vmatpush1.xpose.msra.mxu0 %v1644
        %1646 = vmatprep.subr.mxu0 0.0
        %1647 = vmatpush1.xpose.msra.mxu0 0.0
        %1648 = vmatprep.subr.mxu0 0.0
        %1649 = vmatpush1.xpose.msra.mxu0 0.0
        %1650 = vmatprep.subr.mxu0 0.0
        %1651 = vmatpush1.xpose.msra.mxu0 0.0
        %1652 = vmatprep.subr.mxu0 0.0
        %1653 = vmatpush1.xpose.msra.mxu0 0.0
        %1654 = vmatprep.subr.mxu0 0.0
        %1655 = vmatpush1.xpose.msra.mxu0 0.0
        %1656 = vmatprep.subr.mxu0 0.0
        %1657 = vmatpush1.xpose.msra.mxu0 0.0
        %1658 = vmatprep.subr.mxu0 0.0
        %1659 = vmatpush1.xpose.msra.mxu0 0.0
        %1660 = vmatprep.subr.mxu0 0.0
        %1661 = vmatpush1.xpose.msra.mxu0 0.0
        %1662 = vmatprep.subr.mxu0 0.0
        %1663 = vmatpush1.xpose.msra.mxu0 0.0
        %1664 = vmatprep.subr.mxu0 0.0
        %1665 = vmatpush1.xpose.msra.mxu0 0.0
        %1666 = vmatprep.subr.mxu0 0.0
        %1667 = vmatpush1.xpose.msra.mxu0 0.0
        %1668 = vmatprep.subr.mxu0 0.0
        %1669 = vmatpush1.xpose.msra.mxu0 0.0
        %1670 = vmatprep.subr.mxu0 0.0
        %1671 = vmatpush1.xpose.msra.mxu0 0.0
        %1672 = vmatprep.subr.mxu0 0.0
        %1673 = vmatpush1.xpose.msra.mxu0 0.0
        %1674 = vmatprep.subr.mxu0 0.0
        %1675 = vmatpush1.xpose.msra.mxu0 0.0
        %1676 = vmatprep.subr.mxu0 0.0
        %1677 = vmatpush1.xpose.msra.mxu0 0.0
        %1678 = vmatprep.subr.mxu0 0.0
        %1679 = vmatpush1.xpose.msra.mxu0 0.0
        %1680 = vmatprep.subr.mxu0 0.0
        %1681 = vmatpush1.xpose.msra.mxu0 0.0
        %1682 = vmatprep.subr.mxu0 0.0
        %1683 = vmatpush1.xpose.msra.mxu0 0.0
        %1684 = vmatprep.subr.mxu0 0.0
        %1685 = vmatpush1.xpose.msra.mxu0 0.0
        %1686 = vmatprep.subr.mxu0 0.0
        %1687 = vmatpush1.xpose.msra.mxu0 0.0
        %1688 = vmatprep.subr.mxu0 0.0
        %1689 = vmatpush1.xpose.msra.mxu0 0.0
        %1690 = vmatprep.subr.mxu0 0.0
        %1691 = vmatpush1.xpose.msra.mxu0 0.0
        %1692 = vmatprep.subr.mxu0 0.0
        %1693 = vmatpush1.xpose.msra.mxu0 0.0
        %1694 = vmatprep.subr.mxu0 0.0
        %1695 = vmatpush1.xpose.msra.mxu0 0.0
        %1696 = vmatprep.subr.mxu0 0.0
        %1697 = vmatpush1.xpose.msra.mxu0 0.0
        %1698 = vmatprep.subr.mxu0 0.0
        %1699 = vmatpush1.xpose.msra.mxu0 0.0
        %1700 = vmatprep.subr.mxu0 0.0
        %1701 = vmatpush1.xpose.msra.mxu0 0.0
        %1702 = vmatprep.subr.mxu0 0.0
        %1703 = vmatpush1.xpose.msra.mxu0 0.0
        %1704 = vmatprep.subr.mxu0 0.0
        %1705 = vmatpush1.xpose.msra.mxu0 0.0
        %1706 = vmatprep.subr.mxu0 0.0
        %1707 = vmatpush1.xpose.msra.mxu0 0.0
        %1708 = vmatprep.mubr.f32.mxu0 0.0
        %v1709 = vand.u32 %v1486, 4294901760
        %v1710 = vsub.f32 %v1486, %v1709
        %1711 = vmatmul.mubr.f32.gmra.mrb[0].mxu0 %v1710
        %v1712 = vpop.f32.mrb[0].mxu0
        %v1713 = vadd.f32 %v1639, %v1712
        %v1714 = vpop.f32.mrb[0].mxu0
        %1715 = vdwg.mxu0
        %1716 = vmatprep.subr.mxu0 0.0
        %v1717 = vand.u32 %v1488, 4294901760
        %1718 = vmatpush1.xpose.msra.mxu0 %v1717
        %1719 = vmatprep.subr.mxu0 0.0
        %1720 = vmatpush1.xpose.msra.mxu0 0.0
        %1721 = vmatprep.subr.mxu0 0.0
        %1722 = vmatpush1.xpose.msra.mxu0 0.0
        %1723 = vmatprep.subr.mxu0 0.0
        %1724 = vmatpush1.xpose.msra.mxu0 0.0
        %1725 = vmatprep.subr.mxu0 0.0
        %1726 = vmatpush1.xpose.msra.mxu0 0.0
        %1727 = vmatprep.subr.mxu0 0.0
        %1728 = vmatpush1.xpose.msra.mxu0 0.0
        %1729 = vmatprep.subr.mxu0 0.0
        %1730 = vmatpush1.xpose.msra.mxu0 0.0
        %1731 = vmatprep.subr.mxu0 0.0
        %1732 = vmatpush1.xpose.msra.mxu0 0.0
        %1733 = vmatprep.subr.mxu0 0.0
        %1734 = vmatpush1.xpose.msra.mxu0 0.0
        %1735 = vmatprep.subr.mxu0 0.0
        %1736 = vmatpush1.xpose.msra.mxu0 0.0
        %1737 = vmatprep.subr.mxu0 0.0
        %1738 = vmatpush1.xpose.msra.mxu0 0.0
        %1739 = vmatprep.subr.mxu0 0.0
        %1740 = vmatpush1.xpose.msra.mxu0 0.0
        %1741 = vmatprep.subr.mxu0 0.0
        %1742 = vmatpush1.xpose.msra.mxu0 0.0
        %1743 = vmatprep.subr.mxu0 0.0
        %1744 = vmatpush1.xpose.msra.mxu0 0.0
        %1745 = vmatprep.subr.mxu0 0.0
        %1746 = vmatpush1.xpose.msra.mxu0 0.0
        %1747 = vmatprep.subr.mxu0 0.0
        %1748 = vmatpush1.xpose.msra.mxu0 0.0
        %1749 = vmatprep.subr.mxu0 0.0
        %1750 = vmatpush1.xpose.msra.mxu0 0.0
        %1751 = vmatprep.subr.mxu0 0.0
        %1752 = vmatpush1.xpose.msra.mxu0 0.0
        %1753 = vmatprep.subr.mxu0 0.0
        %1754 = vmatpush1.xpose.msra.mxu0 0.0
        %1755 = vmatprep.subr.mxu0 0.0
        %1756 = vmatpush1.xpose.msra.mxu0 0.0
        %1757 = vmatprep.subr.mxu0 0.0
        %1758 = vmatpush1.xpose.msra.mxu0 0.0
        %1759 = vmatprep.subr.mxu0 0.0
        %1760 = vmatpush1.xpose.msra.mxu0 0.0
        %1761 = vmatprep.subr.mxu0 0.0
        %1762 = vmatpush1.xpose.msra.mxu0 0.0
        %1763 = vmatprep.subr.mxu0 0.0
        %1764 = vmatpush1.xpose.msra.mxu0 0.0
        %1765 = vmatprep.subr.mxu0 0.0
        %1766 = vmatpush1.xpose.msra.mxu0 0.0
        %1767 = vmatprep.subr.mxu0 0.0
        %1768 = vmatpush1.xpose.msra.mxu0 0.0
        %1769 = vmatprep.subr.mxu0 0.0
        %1770 = vmatpush1.xpose.msra.mxu0 0.0
        %1771 = vmatprep.subr.mxu0 0.0
        %1772 = vmatpush1.xpose.msra.mxu0 0.0
        %1773 = vmatprep.subr.mxu0 0.0
        %1774 = vmatpush1.xpose.msra.mxu0 0.0
        %1775 = vmatprep.subr.mxu0 0.0
        %1776 = vmatpush1.xpose.msra.mxu0 0.0
        %1777 = vmatprep.subr.mxu0 0.0
        %1778 = vmatpush1.xpose.msra.mxu0 0.0
        %1779 = vmatprep.subr.mxu0 0.0
        %1780 = vmatpush1.xpose.msra.mxu0 0.0
        %1781 = vmatprep.mubr.f32.mxu0 0.0
        %v1782 = vand.u32 %v1486, 4294901760
        %v1783 = vsub.f32 %v1486, %v1782
        %v1784 = vand.u32 %v1783, 4294901760
        %1785 = vmatmul.mubr.f32.gmra.mrb[0].mxu0 %v1784
        %v1786 = vpop.f32.mrb[0].mxu0
        %v1787 = vadd.f32 %v1713, %v1786
        %v1788 = vpop.f32.mrb[0].mxu0
        %1789 = vdwg.mxu0
        %1790 = vmatprep.subr.mxu0 0.0
        %v1791 = vand.u32 %v1488, 4294901760
        %v1792 = vsub.f32 %v1488, %v1791
        %v1793 = vand.u32 %v1792, 4294901760
        %1794 = vmatpush1.xpose.msra.mxu0 %v1793
        %1795 = vmatprep.subr.mxu0 0.0
        %1796 = vmatpush1.xpose.msra.mxu0 0.0
        %1797 = vmatprep.subr.mxu0 0.0
        %1798 = vmatpush1.xpose.msra.mxu0 0.0
        %1799 = vmatprep.subr.mxu0 0.0
        %1800 = vmatpush1.xpose.msra.mxu0 0.0
        %1801 = vmatprep.subr.mxu0 0.0
        %1802 = vmatpush1.xpose.msra.mxu0 0.0
        %1803 = vmatprep.subr.mxu0 0.0
        %1804 = vmatpush1.xpose.msra.mxu0 0.0
        %1805 = vmatprep.subr.mxu0 0.0
        %1806 = vmatpush1.xpose.msra.mxu0 0.0
        %1807 = vmatprep.subr.mxu0 0.0
        %1808 = vmatpush1.xpose.msra.mxu0 0.0
        %1809 = vmatprep.subr.mxu0 0.0
        %1810 = vmatpush1.xpose.msra.mxu0 0.0
        %1811 = vmatprep.subr.mxu0 0.0
        %1812 = vmatpush1.xpose.msra.mxu0 0.0
        %1813 = vmatprep.subr.mxu0 0.0
        %1814 = vmatpush1.xpose.msra.mxu0 0.0
        %1815 = vmatprep.subr.mxu0 0.0
        %1816 = vmatpush1.xpose.msra.mxu0 0.0
        %1817 = vmatprep.subr.mxu0 0.0
        %1818 = vmatpush1.xpose.msra.mxu0 0.0
        %1819 = vmatprep.subr.mxu0 0.0
        %1820 = vmatpush1.xpose.msra.mxu0 0.0
        %1821 = vmatprep.subr.mxu0 0.0
        %1822 = vmatpush1.xpose.msra.mxu0 0.0
        %1823 = vmatprep.subr.mxu0 0.0
        %1824 = vmatpush1.xpose.msra.mxu0 0.0
        %1825 = vmatprep.subr.mxu0 0.0
        %1826 = vmatpush1.xpose.msra.mxu0 0.0
        %1827 = vmatprep.subr.mxu0 0.0
        %1828 = vmatpush1.xpose.msra.mxu0 0.0
        %1829 = vmatprep.subr.mxu0 0.0
        %1830 = vmatpush1.xpose.msra.mxu0 0.0
        %1831 = vmatprep.subr.mxu0 0.0
        %1832 = vmatpush1.xpose.msra.mxu0 0.0
        %1833 = vmatprep.subr.mxu0 0.0
        %1834 = vmatpush1.xpose.msra.mxu0 0.0
        %1835 = vmatprep.subr.mxu0 0.0
        %1836 = vmatpush1.xpose.msra.mxu0 0.0
        %1837 = vmatprep.subr.mxu0 0.0
        %1838 = vmatpush1.xpose.msra.mxu0 0.0
        %1839 = vmatprep.subr.mxu0 0.0
        %1840 = vmatpush1.xpose.msra.mxu0 0.0
        %1841 = vmatprep.subr.mxu0 0.0
        %1842 = vmatpush1.xpose.msra.mxu0 0.0
        %1843 = vmatprep.subr.mxu0 0.0
        %1844 = vmatpush1.xpose.msra.mxu0 0.0
        %1845 = vmatprep.subr.mxu0 0.0
        %1846 = vmatpush1.xpose.msra.mxu0 0.0
        %1847 = vmatprep.subr.mxu0 0.0
        %1848 = vmatpush1.xpose.msra.mxu0 0.0
        %1849 = vmatprep.subr.mxu0 0.0
        %1850 = vmatpush1.xpose.msra.mxu0 0.0
        %1851 = vmatprep.subr.mxu0 0.0
        %1852 = vmatpush1.xpose.msra.mxu0 0.0
        %1853 = vmatprep.subr.mxu0 0.0
        %1854 = vmatpush1.xpose.msra.mxu0 0.0
        %1855 = vmatprep.subr.mxu0 0.0
        %1856 = vmatpush1.xpose.msra.mxu0 0.0
        %1857 = vmatprep.mubr.f32.mxu0 0.0
        %v1858 = vand.u32 %v1486, 4294901760
        %1859 = vmatmul.mubr.f32.gmra.mrb[0].mxu0 %v1858
        %v1860 = vpop.f32.mrb[0].mxu0
        %v1861 = vadd.f32 %v1787, %v1860
        %v1862 = vpop.f32.mrb[0].mxu0
        %1863 = vdwg.mxu0
        %1864 = vmatprep.subr.mxu0 0.0
        %v1865 = vand.u32 %v1488, 4294901760
        %1866 = vmatpush1.xpose.msra.mxu0 %v1865
        %1867 = vmatprep.subr.mxu0 0.0
        %1868 = vmatpush1.xpose.msra.mxu0 0.0
        %1869 = vmatprep.subr.mxu0 0.0
        %1870 = vmatpush1.xpose.msra.mxu0 0.0
        %1871 = vmatprep.subr.mxu0 0.0
        %1872 = vmatpush1.xpose.msra.mxu0 0.0
        %1873 = vmatprep.subr.mxu0 0.0
        %1874 = vmatpush1.xpose.msra.mxu0 0.0
        %1875 = vmatprep.subr.mxu0 0.0
        %1876 = vmatpush1.xpose.msra.mxu0 0.0
        %1877 = vmatprep.subr.mxu0 0.0
        %1878 = vmatpush1.xpose.msra.mxu0 0.0
        %1879 = vmatprep.subr.mxu0 0.0
        %1880 = vmatpush1.xpose.msra.mxu0 0.0
        %1881 = vmatprep.subr.mxu0 0.0
        %1882 = vmatpush1.xpose.msra.mxu0 0.0
        %1883 = vmatprep.subr.mxu0 0.0
        %1884 = vmatpush1.xpose.msra.mxu0 0.0
        %1885 = vmatprep.subr.mxu0 0.0
        %1886 = vmatpush1.xpose.msra.mxu0 0.0
        %1887 = vmatprep.subr.mxu0 0.0
        %1888 = vmatpush1.xpose.msra.mxu0 0.0
        %1889 = vmatprep.subr.mxu0 0.0
        %1890 = vmatpush1.xpose.msra.mxu0 0.0
        %1891 = vmatprep.subr.mxu0 0.0
        %1892 = vmatpush1.xpose.msra.mxu0 0.0
        %1893 = vmatprep.subr.mxu0 0.0
        %1894 = vmatpush1.xpose.msra.mxu0 0.0
        %1895 = vmatprep.subr.mxu0 0.0
        %1896 = vmatpush1.xpose.msra.mxu0 0.0
        %1897 = vmatprep.subr.mxu0 0.0
        %1898 = vmatpush1.xpose.msra.mxu0 0.0
        %1899 = vmatprep.subr.mxu0 0.0
        %1900 = vmatpush1.xpose.msra.mxu0 0.0
        %1901 = vmatprep.subr.mxu0 0.0
        %1902 = vmatpush1.xpose.msra.mxu0 0.0
        %1903 = vmatprep.subr.mxu0 0.0
        %1904 = vmatpush1.xpose.msra.mxu0 0.0
        %1905 = vmatprep.subr.mxu0 0.0
        %1906 = vmatpush1.xpose.msra.mxu0 0.0
        %1907 = vmatprep.subr.mxu0 0.0
        %1908 = vmatpush1.xpose.msra.mxu0 0.0
        %1909 = vmatprep.subr.mxu0 0.0
        %1910 = vmatpush1.xpose.msra.mxu0 0.0
        %1911 = vmatprep.subr.mxu0 0.0
        %1912 = vmatpush1.xpose.msra.mxu0 0.0
        %1913 = vmatprep.subr.mxu0 0.0
        %1914 = vmatpush1.xpose.msra.mxu0 0.0
        %1915 = vmatprep.subr.mxu0 0.0
        %1916 = vmatpush1.xpose.msra.mxu0 0.0
        %1917 = vmatprep.subr.mxu0 0.0
        %1918 = vmatpush1.xpose.msra.mxu0 0.0
        %1919 = vmatprep.subr.mxu0 0.0
        %1920 = vmatpush1.xpose.msra.mxu0 0.0
        %1921 = vmatprep.subr.mxu0 0.0
        %1922 = vmatpush1.xpose.msra.mxu0 0.0
        %1923 = vmatprep.subr.mxu0 0.0
        %1924 = vmatpush1.xpose.msra.mxu0 0.0
        %1925 = vmatprep.subr.mxu0 0.0
        %1926 = vmatpush1.xpose.msra.mxu0 0.0
        %1927 = vmatprep.subr.mxu0 0.0
        %1928 = vmatpush1.xpose.msra.mxu0 0.0
        %1929 = vmatprep.mubr.f32.mxu0 0.0
        %v1930 = vand.u32 %v1486, 4294901760
        %1931 = vmatmul.mubr.f32.gmra.mrb[0].mxu0 %v1930
        %v1932 = vpop.f32.mrb[0].mxu0
        %v1933 = vadd.f32 %v1861, %v1932
        %v1934 = vpop.f32.mrb[0].mxu0
        %1935 = vdwg.mxu0
        %v1936 = vld [vmem:[%s481] sm:$0xff]
        %v1937 = vmul.f32 %v1933, %v1936
        %v1938 = vld [vmem:[%s425] sm:$0xff]
        %v1939 = vadd.f32 %v1937, %v1938
        %vm1940 = vcmask 64512
        %1941 = vst.msk [vmem:[%s474] sm:$0xff] %vm1940, %v1939
        %s1942 = sand.u32 %s247, 1
        %s1943 = scalar_lea.sflag [#allocation4], %s1942
        %s1944 = sand.u32 %s247, 1
        %s1945 = smul.addr %s1944, 8
        %s1946 = scalar_lea.vmem [#allocation13], %s1945
        // Predicated region
        $region77: #{tpu_custom_call.1} parent=51 // pred_check
          %p1947 = pneg %p257
        $region78: #{tpu_custom_call.1} parent=51 // pred_check_branch
          %1949 = sbr.rel (%p1947) target = $region80
        $region79: #{tpu_custom_call.1} parent=51 // pred_region
          %s1951 = ssub.s32 128, 128
          %1952 = vsyncadd %s1943, %s1951
          %s1953 = smul.addr %s36, 2
          %s1954 = sadd.s32 %s37, %s1953
          %s1955 = smul.addr %s1954, 128
          %s1956 = scalar_lea.hbm %s8, %s1955
          %s1958 = sshll.u32 %s1946, 4
          %s1959 = int_to_ptr.vmem [resolvable:$true] %s1958
          %1961 = dma.vmem_to_hbm [thread:$0]  %s1959, 128, %s1956, %s1943
        $region80: #{tpu_custom_call.1} parent=51 // pred_fallthru
          _
      $region52: #{tpu_custom_call.1} parent=5 // pred_fallthru
        _
      %p1962 = scmp.le.s32.totalorder 2, %s27
      // Predicated region
      $region81: #{tpu_custom_call.1} parent=5 // pred_check
        %p1963 = pneg %p1962
      $region82: #{tpu_custom_call.1} parent=5 // pred_check_branch
        %1965 = sbr.rel (%p1963) target = $region84
      $region83: #{tpu_custom_call.1} parent=5 // pred_region
        %s1966 = ssub.s32 %s27, 2
        // Predicated region
        $region85: #{tpu_custom_call.1} parent=83 // pred_check
          %p1967 = pneg %p263
        $region86: #{tpu_custom_call.1} parent=83 // pred_check_branch
          %1969 = sbr.rel (%p1967) target = $region88
        $region87: #{tpu_custom_call.1} parent=83 // pred_region
          %s1970 = sand.u32 %s248, 1
          %s1971 = scalar_lea.sflag [#allocation4], %s1970
          %s1972 = sand.u32 %s248, 1
          %s1973 = smul.addr %s1972, 8
          %s1974 = scalar_lea.vmem [#allocation13], %s1973
          %1975 = dma.done %s1971, 128
        $region88: #{tpu_custom_call.1} parent=83 // pred_fallthru
          _
      $region84: #{tpu_custom_call.1} parent=5 // pred_fallthru
        _
    $region6: #{tpu_custom_call.1} parent=1 // loop_footer
      %s31 = sadd.s32 1, %s27
    $region7: #{tpu_custom_call.1} parent=1 // loop_footer_branch
      %26 = sbr.rel target = $region3
    $region8: #{tpu_custom_call.1} parent=1 // loop_exit
      _
    %1976 = vsyncpa [#allocation3], 1
    %s1977 = scalar_lea.sflag [#allocation3], 1
    %1978 = vsyncpa %s1977, 1
    %1979 = vsyncpa [#allocation6], 1
    %s1980 = scalar_lea.sflag [#allocation6], 1
    %1981 = vsyncpa %s1980, 1
    %1982 = vsyncpa [#allocation9], 1
    %1983 = vsyncpa [#allocation12], 1
    %s1984 = scalar_lea.sflag [#allocation12], 1
    %1985 = vsyncpa %s1984, 1
    %1986 = vsyncpa [#allocation4], 1
    %s1987 = scalar_lea.sflag [#allocation4], 1
    %1988 = vsyncpa %s1987, 1

</llo_original>
